<compile_context>
chip_gen: v7x
topology: tpu7x:2x2x1
jax: 0.10.0
libtpu: 0.0.40
codegen_flags: <defaults>
</compile_context>

<pallas_src>
import jax
import jax.numpy as jnp
from jax.experimental import pallas as pl
from jax.experimental.pallas import tpu as pltpu


def mul_conv1x1_kernel(s_ref, x_ref, w_ref, o_ref):
    # s_ref: (1, Cin, 1)    f32 per-channel scale (broadcast over HW lanes)
    # x_ref: (1, Cin, HW)   f32 activations in natural NCHW-flattened layout
    # w_ref: (Cout, Cin)    bf16 1x1-conv weight in its natural layout
    # o_ref: (1, Cout, HW)  output tile in natural NCHW-flattened layout
    xs = x_ref[0] * s_ref[0]                           # f32 VPU multiply (hidden under DMA)
    o_ref[0] = jnp.dot(
        w_ref[...],
        xs.astype(jnp.bfloat16),                       # cast the product only, not raw inputs
        preferred_element_type=jnp.float32,            # f32 MXU accumulation
    ).astype(o_ref.dtype)


def prepare_weight(w):
    """One-time weight prep (hoisted out of the per-call path).

    w: (Cout, Cin, 1, 1) f32  ->  (Cout, Cin) bf16
    """
    Cout, Cin = w.shape[0], w.shape[1]
    return w.reshape(Cout, Cin).astype(jnp.bfloat16)


def mul_conv1x1(x, scale, w2):
    """x: (N, Cin, H, W), scale: (N, Cin, 1, 1), w2: (Cout, Cin) bf16 -> (N, Cout, H, W)."""
    N, Cin, H, W = x.shape
    Cout = w2.shape[0]
    HW = H * W

    # Contiguous reshapes only — no data movement, no extra XLA kernels.
    x2 = x.reshape(N, Cin, HW)
    s2 = scale.reshape(N, Cin, 1)

    cost = pl.CostEstimate(
        flops=2 * N * HW * Cin * Cout,
        transcendentals=0,
        bytes_accessed=(
            x2.size * x2.dtype.itemsize
            + s2.size * s2.dtype.itemsize
            + w2.size * w2.dtype.itemsize
            + N * Cout * HW * jnp.dtype(x.dtype).itemsize
        ),
    )

    out = pl.pallas_call(
        mul_conv1x1_kernel,
        out_shape=jax.ShapeDtypeStruct((N, Cout, HW), x.dtype),
        grid_spec=pltpu.PrefetchScalarGridSpec(
            num_scalar_prefetch=0,
            grid=(N,),
            in_specs=[
                pl.BlockSpec((1, Cin, 1), lambda n: (n, 0, 0)),
                pl.BlockSpec((1, Cin, HW), lambda n: (n, 0, 0)),
                pl.BlockSpec((Cout, Cin), lambda n: (0, 0)),   # weight resident across N
            ],
            out_specs=pl.BlockSpec((1, Cout, HW), lambda n: (n, 0, 0)),
        ),
        compiler_params=pltpu.CompilerParams(
            dimension_semantics=("arbitrary",),
        ),
        cost_estimate=cost,
    )(s2, x2, w2)

    return out.reshape(N, Cout, H, W)                  # contiguous reshape, no data movement


# TODO(synk): for real wins, fuse this mul+1x1 with the adjacent RegNet ops
# (SE gate producer / following BN) into one kernel — this op alone is launch-bound.


if __name__ == "__main__":
    key = jax.random.PRNGKey(0)
    k1, k2, k3 = jax.random.split(key, 3)

    # Shapes implied by the module: x209 (1,440,7,7), x214 (1,440,1,1),
    # Conv2d(440, 440, kernel_size=1, bias=False).
    N, C, H, W = 1, 440, 7, 7
    x209 = jax.random.normal(k1, (N, C, H, W), dtype=jnp.float32)
    x214 = jax.random.normal(k2, (N, C, 1, 1), dtype=jnp.float32)
    w = jax.random.normal(k3, (C, C, 1, 1), dtype=jnp.float32) * 0.02

    # Weight prep done once, outside the per-call (jitted) path.
    w2 = jax.block_until_ready(prepare_weight(w))

    run = jax.jit(mul_conv1x1)
    out = run(x209, x214, w2)
    out = jax.block_until_ready(out)
    assert out.shape == (N, C, H, W)

    # Reference with the same bf16 rounding as the kernel (f32 accumulation).
    xs = x209 * x214
    ref_bf16 = jnp.einsum(
        "oc,nchw->nohw",
        w.reshape(C, C).astype(jnp.bfloat16).astype(jnp.float32),
        xs.astype(jnp.bfloat16).astype(jnp.float32),
    )
    assert jnp.allclose(out, ref_bf16, atol=5e-3, rtol=5e-3), "mismatch vs bf16 reference"

    # Loose sanity check against full-f32 math.
    ref_f32 = jnp.einsum("oc,nchw->nohw", w.reshape(C, C), xs)
    assert jnp.allclose(out, ref_f32, atol=5e-2, rtol=5e-2), "mismatch vs f32 reference"

    print("KERNEL_OK")
</pallas_src>

<mosaic_0001>
module attributes {stable_mosaic.version = 11 : i64} {
  func.func @mul_conv1x1_kernel(%arg0: i32, %arg1: memref<1x440x1xf32, #tpu.memory_space<vmem>>, %arg2: memref<1x440x49xf32, #tpu.memory_space<vmem>>, %arg3: memref<440x440xbf16, #tpu.memory_space<vmem>>, %arg4: memref<1x440x49xf32, #tpu.memory_space<vmem>>) attributes {dimension_semantics = [#tpu.dimension_semantics<arbitrary>], iteration_bounds = array<i64: 1>, scalar_prefetch = 0 : i64, scratch_operands = 0 : i64, tpu.core_type = #tpu.core_type<tc>, window_params = [{transform_indices = @transform_0, window_bounds = array<i64: 1, 440, 1>}, {transform_indices = @transform_1, window_bounds = array<i64: 1, 440, 49>}, {pipeline_mode = #tpu.pipeline_mode<synchronous>, transform_indices = @transform_2, window_bounds = array<i64: 440, 440>}, {transform_indices = @transform_3, window_bounds = array<i64: 1, 440, 49>}]} {
    %c0 = arith.constant 0 : index
    %c0_0 = arith.constant 0 : index
    %c0_1 = arith.constant 0 : index
    %0 = vector.load %arg2[%c0, %c0_0, %c0_1] : memref<1x440x49xf32, #tpu.memory_space<vmem>>, vector<1x440x49xf32>
    %1 = vector.shape_cast %0 : vector<1x440x49xf32> to vector<440x49xf32>
    %c0_2 = arith.constant 0 : index
    %c0_3 = arith.constant 0 : index
    %c0_4 = arith.constant 0 : index
    %2 = vector.load %arg1[%c0_2, %c0_3, %c0_4] : memref<1x440x1xf32, #tpu.memory_space<vmem>>, vector<1x440x1xf32>
    %3 = vector.shape_cast %2 : vector<1x440x1xf32> to vector<440x1xf32>
    %4 = vector.broadcast %3 : vector<440x1xf32> to vector<440x49xf32>
    %5 = arith.mulf %1, %4 : vector<440x49xf32>
    %c0_5 = arith.constant 0 : index
    %c0_6 = arith.constant 0 : index
    %6 = vector.load %arg3[%c0_5, %c0_6] : memref<440x440xbf16, #tpu.memory_space<vmem>>, vector<440x440xbf16>
    %7 = arith.truncf %5 : vector<440x49xf32> to vector<440x49xbf16>
    %cst = arith.constant dense<0.000000e+00> : vector<440x49xf32>
    %8 = tpu.matmul %6, %7, %cst {dimension_numbers = #tpu.dot_dimension_numbers<[1], [0], [0], [1], [0, 0, 1, 1], [], []>} : vector<440x440xbf16>, vector<440x49xbf16>, vector<440x49xf32> -> vector<440x49xf32>
    %c0_7 = arith.constant 0 : index
    %c0_8 = arith.constant 0 : index
    %c0_9 = arith.constant 0 : index
    %9 = vector.load %arg4[%c0_7, %c0_8, %c0_9] : memref<1x440x49xf32, #tpu.memory_space<vmem>>, vector<1x440x49xf32>
    %10 = vector.shape_cast %9 : vector<1x440x49xf32> to vector<440x49xf32>
    %11 = vector.shape_cast %8 : vector<440x49xf32> to vector<1x440x49xf32>
    tpu.vector_store %arg4[%c0_7, %c0_8, %c0_9], %11 {strides = array<i32>} : memref<1x440x49xf32, #tpu.memory_space<vmem>>, vector<1x440x49xf32>,
    return
  }
  func.func @transform_0(%arg0: i32) -> (i32, i32, i32) {
    %c0_i32 = arith.constant 0 : i32
    %c0_i32_0 = arith.constant 0 : i32
    %c0_i32_1 = arith.constant 0 : i32
    return %arg0, %c0_i32, %c0_i32_0 : i32, i32, i32
  }
  func.func @transform_1(%arg0: i32) -> (i32, i32, i32) {
    %c0_i32 = arith.constant 0 : i32
    %c0_i32_0 = arith.constant 0 : i32
    %c0_i32_1 = arith.constant 0 : i32
    return %arg0, %c0_i32, %c0_i32_0 : i32, i32, i32
  }
  func.func @transform_2(%arg0: i32) -> (i32, i32) {
    %c0_i32 = arith.constant 0 : i32
    %c0_i32_0 = arith.constant 0 : i32
    %c0_i32_1 = arith.constant 0 : i32
    return %c0_i32, %c0_i32_0 : i32, i32
  }
  func.func @transform_3(%arg0: i32) -> (i32, i32, i32) {
    %c0_i32 = arith.constant 0 : i32
    %c0_i32_0 = arith.constant 0 : i32
    %c0_i32_1 = arith.constant 0 : i32
    return %arg0, %c0_i32, %c0_i32_0 : i32, i32, i32
  }
}

</mosaic_0001>

<llo_original>
// kernel: mul_conv1x1.1
$region0: #{mul_conv1x1.1}
  #allocation0 [shape = 'u32[]', space=smem, size = 0x4, offset = 0x4, fixed_abs, tag = 'smem constant byte address 0x4 - core index']
  #allocation1 [shape = 'u32[144,128]{1,0:T(1,128)}', space=vmem, size = 0x12000, scoped, tag = 'internal scratch']
  %s0 = inlined_call_operand.vmem [shape: f32[1,440,1], index: 0, kind: input, shape index: {}]
  %s1 = inlined_call_operand.vmem [shape: f32[1,440,49], index: 1, kind: input, shape index: {}]
  %s2 = inlined_call_operand.vmem [shape: bf16[440,440], index: 2, kind: input, shape index: {}]
  %s3 = inlined_call_operand.vmem [shape: f32[1,440,49], index: 3, kind: output, shape index: {}]
  %s4 = sld [smem:[#allocation0]]
  $region22: #{mul_conv1x1.1} parent=0
    _
  %s6 = ssub.s32 1, %s4
  %s7 = scalar_select 0, %s6, %s4
  // Predicated region
  $region2: #{mul_conv1x1.1} parent=0 // pred_check
    _
  $region3: #{mul_conv1x1.1} parent=0 // pred_check_branch
    %9 = sbr.rel (0) target = $region5
  $region4: #{mul_conv1x1.1} parent=0 // pred_region
    _
  $region5: #{mul_conv1x1.1} parent=0 // pred_fallthru
    _
  // Predicated region
  $region6: #{mul_conv1x1.1} parent=0 // pred_check
    _
  $region7: #{mul_conv1x1.1} parent=0 // pred_check_branch
    %11 = sbr.rel (0) target = $region9
  $region8: #{mul_conv1x1.1} parent=0 // pred_region
    _
  $region9: #{mul_conv1x1.1} parent=0 // pred_fallthru
    _
  // Predicated region
  $region10: #{mul_conv1x1.1} parent=0 // pred_check
    _
  $region11: #{mul_conv1x1.1} parent=0 // pred_check_branch
    %13 = sbr.rel (0) target = $region13
  $region12: #{mul_conv1x1.1} parent=0 // pred_region
    _
  $region13: #{mul_conv1x1.1} parent=0 // pred_fallthru
    _
  %v15 = vld [vmem:[%s1] sm:$0xff]
  %v16 = vld [vmem:[%s1 + $0x8] sm:$0xff]
  %v17 = vld [vmem:[%s1 + $0x10] sm:$0xff]
  %v18 = vld [vmem:[%s1 + $0x18] sm:$0xff]
  %v19 = vld [vmem:[%s1 + $0x20] sm:$0xff]
  %v20 = vld [vmem:[%s1 + $0x28] sm:$0xff]
  %v21 = vld [vmem:[%s1 + $0x30] sm:$0xff]
  %v22 = vld [vmem:[%s1 + $0x38] sm:$0xff]
  %v23 = vld [vmem:[%s1 + $0x40] sm:$0xff]
  %v24 = vld [vmem:[%s1 + $0x48] sm:$0xff]
  %v25 = vld [vmem:[%s1 + $0x50] sm:$0xff]
  %v26 = vld [vmem:[%s1 + $0x58] sm:$0xff]
  %v27 = vld [vmem:[%s1 + $0x60] sm:$0xff]
  %v28 = vld [vmem:[%s1 + $0x68] sm:$0xff]
  %v29 = vld [vmem:[%s1 + $0x70] sm:$0xff]
  %v30 = vld [vmem:[%s1 + $0x78] sm:$0xff]
  %v31 = vld [vmem:[%s1 + $0x80] sm:$0xff]
  %v32 = vld [vmem:[%s1 + $0x88] sm:$0xff]
  %v33 = vld [vmem:[%s1 + $0x90] sm:$0xff]
  %v34 = vld [vmem:[%s1 + $0x98] sm:$0xff]
  %v35 = vld [vmem:[%s1 + $0xa0] sm:$0xff]
  %v36 = vld [vmem:[%s1 + $0xa8] sm:$0xff]
  %v37 = vld [vmem:[%s1 + $0xb0] sm:$0xff]
  %v38 = vld [vmem:[%s1 + $0xb8] sm:$0xff]
  %v39 = vld [vmem:[%s1 + $0xc0] sm:$0xff]
  %v40 = vld [vmem:[%s1 + $0xc8] sm:$0xff]
  %v41 = vld [vmem:[%s1 + $0xd0] sm:$0xff]
  %v42 = vld [vmem:[%s1 + $0xd8] sm:$0xff]
  %v43 = vld [vmem:[%s1 + $0xe0] sm:$0xff]
  %v44 = vld [vmem:[%s1 + $0xe8] sm:$0xff]
  %v45 = vld [vmem:[%s1 + $0xf0] sm:$0xff]
  %v46 = vld [vmem:[%s1 + $0xf8] sm:$0xff]
  %v47 = vld [vmem:[%s1 + $0x100] sm:$0xff]
  %v48 = vld [vmem:[%s1 + $0x108] sm:$0xff]
  %v49 = vld [vmem:[%s1 + $0x110] sm:$0xff]
  %v50 = vld [vmem:[%s1 + $0x118] sm:$0xff]
  %v51 = vld [vmem:[%s1 + $0x120] sm:$0xff]
  %v52 = vld [vmem:[%s1 + $0x128] sm:$0xff]
  %v53 = vld [vmem:[%s1 + $0x130] sm:$0xff]
  %v54 = vld [vmem:[%s1 + $0x138] sm:$0xff]
  %v55 = vld [vmem:[%s1 + $0x140] sm:$0xff]
  %v56 = vld [vmem:[%s1 + $0x148] sm:$0xff]
  %v57 = vld [vmem:[%s1 + $0x150] sm:$0xff]
  %v58 = vld [vmem:[%s1 + $0x158] sm:$0xff]
  %v59 = vld [vmem:[%s1 + $0x160] sm:$0xff]
  %v60 = vld [vmem:[%s1 + $0x168] sm:$0xff]
  %v61 = vld [vmem:[%s1 + $0x170] sm:$0xff]
  %v62 = vld [vmem:[%s1 + $0x178] sm:$0xff]
  %v63 = vld [vmem:[%s1 + $0x180] sm:$0xff]
  %v64 = vld [vmem:[%s1 + $0x188] sm:$0xff]
  %v65 = vld [vmem:[%s1 + $0x190] sm:$0xff]
  %v66 = vld [vmem:[%s1 + $0x198] sm:$0xff]
  %v67 = vld [vmem:[%s1 + $0x1a0] sm:$0xff]
  %v68 = vld [vmem:[%s1 + $0x1a8] sm:$0xff]
  %v69 = vld [vmem:[%s1 + $0x1b0] sm:$0xff]
  %v70 = vld [vmem:[%s0] sm:$0xff]
  %v71 = vld [vmem:[%s0 + $0x8] sm:$0xff]
  %v72 = vld [vmem:[%s0 + $0x10] sm:$0xff]
  %v73 = vld [vmem:[%s0 + $0x18] sm:$0xff]
  %v74 = vld [vmem:[%s0 + $0x20] sm:$0xff]
  %v75 = vld [vmem:[%s0 + $0x28] sm:$0xff]
  %v76 = vld [vmem:[%s0 + $0x30] sm:$0xff]
  %v77 = vld [vmem:[%s0 + $0x38] sm:$0xff]
  %v78 = vld [vmem:[%s0 + $0x40] sm:$0xff]
  %v79 = vld [vmem:[%s0 + $0x48] sm:$0xff]
  %v80 = vld [vmem:[%s0 + $0x50] sm:$0xff]
  %v81 = vld [vmem:[%s0 + $0x58] sm:$0xff]
  %v82 = vld [vmem:[%s0 + $0x60] sm:$0xff]
  %v83 = vld [vmem:[%s0 + $0x68] sm:$0xff]
  %v84 = vld [vmem:[%s0 + $0x70] sm:$0xff]
  %v85 = vld [vmem:[%s0 + $0x78] sm:$0xff]
  %v86 = vld [vmem:[%s0 + $0x80] sm:$0xff]
  %v87 = vld [vmem:[%s0 + $0x88] sm:$0xff]
  %v88 = vld [vmem:[%s0 + $0x90] sm:$0xff]
  %v89 = vld [vmem:[%s0 + $0x98] sm:$0xff]
  %v90 = vld [vmem:[%s0 + $0xa0] sm:$0xff]
  %v91 = vld [vmem:[%s0 + $0xa8] sm:$0xff]
  %v92 = vld [vmem:[%s0 + $0xb0] sm:$0xff]
  %v93 = vld [vmem:[%s0 + $0xb8] sm:$0xff]
  %v94 = vld [vmem:[%s0 + $0xc0] sm:$0xff]
  %v95 = vld [vmem:[%s0 + $0xc8] sm:$0xff]
  %v96 = vld [vmem:[%s0 + $0xd0] sm:$0xff]
  %v97 = vld [vmem:[%s0 + $0xd8] sm:$0xff]
  %v98 = vld [vmem:[%s0 + $0xe0] sm:$0xff]
  %v99 = vld [vmem:[%s0 + $0xe8] sm:$0xff]
  %v100 = vld [vmem:[%s0 + $0xf0] sm:$0xff]
  %v101 = vld [vmem:[%s0 + $0xf8] sm:$0xff]
  %v102 = vld [vmem:[%s0 + $0x100] sm:$0xff]
  %v103 = vld [vmem:[%s0 + $0x108] sm:$0xff]
  %v104 = vld [vmem:[%s0 + $0x110] sm:$0xff]
  %v105 = vld [vmem:[%s0 + $0x118] sm:$0xff]
  %v106 = vld [vmem:[%s0 + $0x120] sm:$0xff]
  %v107 = vld [vmem:[%s0 + $0x128] sm:$0xff]
  %v108 = vld [vmem:[%s0 + $0x130] sm:$0xff]
  %v109 = vld [vmem:[%s0 + $0x138] sm:$0xff]
  %v110 = vld [vmem:[%s0 + $0x140] sm:$0xff]
  %v111 = vld [vmem:[%s0 + $0x148] sm:$0xff]
  %v112 = vld [vmem:[%s0 + $0x150] sm:$0xff]
  %v113 = vld [vmem:[%s0 + $0x158] sm:$0xff]
  %v114 = vld [vmem:[%s0 + $0x160] sm:$0xff]
  %v115 = vld [vmem:[%s0 + $0x168] sm:$0xff]
  %v116 = vld [vmem:[%s0 + $0x170] sm:$0xff]
  %v117 = vld [vmem:[%s0 + $0x178] sm:$0xff]
  %v118 = vld [vmem:[%s0 + $0x180] sm:$0xff]
  %v119 = vld [vmem:[%s0 + $0x188] sm:$0xff]
  %v120 = vld [vmem:[%s0 + $0x190] sm:$0xff]
  %v121 = vld [vmem:[%s0 + $0x198] sm:$0xff]
  %v122 = vld [vmem:[%s0 + $0x1a0] sm:$0xff]
  %v123 = vld [vmem:[%s0 + $0x1a8] sm:$0xff]
  %v124 = vld [vmem:[%s0 + $0x1b0] sm:$0xff]
  %126 = vset.pattern.permute.xlu0 0
  %127 = vperm.xlu0 %126, %v70
  %v128 = vpop.permute.xlu0 %127
  %131 = vset.pattern.permute.xlu0 0
  %132 = vperm.xlu0 %131, %v71
  %v133 = vpop.permute.xlu0 %132
  %136 = vset.pattern.permute.xlu0 0
  %137 = vperm.xlu0 %136, %v72
  %v138 = vpop.permute.xlu0 %137
  %141 = vset.pattern.permute.xlu0 0
  %142 = vperm.xlu0 %141, %v73
  %v143 = vpop.permute.xlu0 %142
  %146 = vset.pattern.permute.xlu0 0
  %147 = vperm.xlu0 %146, %v74
  %v148 = vpop.permute.xlu0 %147
  %151 = vset.pattern.permute.xlu0 0
  %152 = vperm.xlu0 %151, %v75
  %v153 = vpop.permute.xlu0 %152
  %156 = vset.pattern.permute.xlu0 0
  %157 = vperm.xlu0 %156, %v76
  %v158 = vpop.permute.xlu0 %157
  %161 = vset.pattern.permute.xlu0 0
  %162 = vperm.xlu0 %161, %v77
  %v163 = vpop.permute.xlu0 %162
  %166 = vset.pattern.permute.xlu0 0
  %167 = vperm.xlu0 %166, %v78
  %v168 = vpop.permute.xlu0 %167
  %171 = vset.pattern.permute.xlu0 0
  %172 = vperm.xlu0 %171, %v79
  %v173 = vpop.permute.xlu0 %172
  %176 = vset.pattern.permute.xlu0 0
  %177 = vperm.xlu0 %176, %v80
  %v178 = vpop.permute.xlu0 %177
  %181 = vset.pattern.permute.xlu0 0
  %182 = vperm.xlu0 %181, %v81
  %v183 = vpop.permute.xlu0 %182
  %186 = vset.pattern.permute.xlu0 0
  %187 = vperm.xlu0 %186, %v82
  %v188 = vpop.permute.xlu0 %187
  %191 = vset.pattern.permute.xlu0 0
  %192 = vperm.xlu0 %191, %v83
  %v193 = vpop.permute.xlu0 %192
  %196 = vset.pattern.permute.xlu0 0
  %197 = vperm.xlu0 %196, %v84
  %v198 = vpop.permute.xlu0 %197
  %201 = vset.pattern.permute.xlu0 0
  %202 = vperm.xlu0 %201, %v85
  %v203 = vpop.permute.xlu0 %202
  %206 = vset.pattern.permute.xlu0 0
  %207 = vperm.xlu0 %206, %v86
  %v208 = vpop.permute.xlu0 %207
  %211 = vset.pattern.permute.xlu0 0
  %212 = vperm.xlu0 %211, %v87
  %v213 = vpop.permute.xlu0 %212
  %216 = vset.pattern.permute.xlu0 0
  %217 = vperm.xlu0 %216, %v88
  %v218 = vpop.permute.xlu0 %217
  %221 = vset.pattern.permute.xlu0 0
  %222 = vperm.xlu0 %221, %v89
  %v223 = vpop.permute.xlu0 %222
  %226 = vset.pattern.permute.xlu0 0
  %227 = vperm.xlu0 %226, %v90
  %v228 = vpop.permute.xlu0 %227
  %231 = vset.pattern.permute.xlu0 0
  %232 = vperm.xlu0 %231, %v91
  %v233 = vpop.permute.xlu0 %232
  %236 = vset.pattern.permute.xlu0 0
  %237 = vperm.xlu0 %236, %v92
  %v238 = vpop.permute.xlu0 %237
  %241 = vset.pattern.permute.xlu0 0
  %242 = vperm.xlu0 %241, %v93
  %v243 = vpop.permute.xlu0 %242
  %246 = vset.pattern.permute.xlu0 0
  %247 = vperm.xlu0 %246, %v94
  %v248 = vpop.permute.xlu0 %247
  %251 = vset.pattern.permute.xlu0 0
  %252 = vperm.xlu0 %251, %v95
  %v253 = vpop.permute.xlu0 %252
  %256 = vset.pattern.permute.xlu0 0
  %257 = vperm.xlu0 %256, %v96
  %v258 = vpop.permute.xlu0 %257
  %261 = vset.pattern.permute.xlu0 0
  %262 = vperm.xlu0 %261, %v97
  %v263 = vpop.permute.xlu0 %262
  %266 = vset.pattern.permute.xlu0 0
  %267 = vperm.xlu0 %266, %v98
  %v268 = vpop.permute.xlu0 %267
  %271 = vset.pattern.permute.xlu0 0
  %272 = vperm.xlu0 %271, %v99
  %v273 = vpop.permute.xlu0 %272
  %276 = vset.pattern.permute.xlu0 0
  %277 = vperm.xlu0 %276, %v100
  %v278 = vpop.permute.xlu0 %277
  %281 = vset.pattern.permute.xlu0 0
  %282 = vperm.xlu0 %281, %v101
  %v283 = vpop.permute.xlu0 %282
  %286 = vset.pattern.permute.xlu0 0
  %287 = vperm.xlu0 %286, %v102
  %v288 = vpop.permute.xlu0 %287
  %291 = vset.pattern.permute.xlu0 0
  %292 = vperm.xlu0 %291, %v103
  %v293 = vpop.permute.xlu0 %292
  %296 = vset.pattern.permute.xlu0 0
  %297 = vperm.xlu0 %296, %v104
  %v298 = vpop.permute.xlu0 %297
  %301 = vset.pattern.permute.xlu0 0
  %302 = vperm.xlu0 %301, %v105
  %v303 = vpop.permute.xlu0 %302
  %306 = vset.pattern.permute.xlu0 0
  %307 = vperm.xlu0 %306, %v106
  %v308 = vpop.permute.xlu0 %307
  %311 = vset.pattern.permute.xlu0 0
  %312 = vperm.xlu0 %311, %v107
  %v313 = vpop.permute.xlu0 %312
  %316 = vset.pattern.permute.xlu0 0
  %317 = vperm.xlu0 %316, %v108
  %v318 = vpop.permute.xlu0 %317
  %321 = vset.pattern.permute.xlu0 0
  %322 = vperm.xlu0 %321, %v109
  %v323 = vpop.permute.xlu0 %322
  %326 = vset.pattern.permute.xlu0 0
  %327 = vperm.xlu0 %326, %v110
  %v328 = vpop.permute.xlu0 %327
  %331 = vset.pattern.permute.xlu0 0
  %332 = vperm.xlu0 %331, %v111
  %v333 = vpop.permute.xlu0 %332
  %336 = vset.pattern.permute.xlu0 0
  %337 = vperm.xlu0 %336, %v112
  %v338 = vpop.permute.xlu0 %337
  %341 = vset.pattern.permute.xlu0 0
  %342 = vperm.xlu0 %341, %v113
  %v343 = vpop.permute.xlu0 %342
  %346 = vset.pattern.permute.xlu0 0
  %347 = vperm.xlu0 %346, %v114
  %v348 = vpop.permute.xlu0 %347
  %351 = vset.pattern.permute.xlu0 0
  %352 = vperm.xlu0 %351, %v115
  %v353 = vpop.permute.xlu0 %352
  %356 = vset.pattern.permute.xlu0 0
  %357 = vperm.xlu0 %356, %v116
  %v358 = vpop.permute.xlu0 %357
  %361 = vset.pattern.permute.xlu0 0
  %362 = vperm.xlu0 %361, %v117
  %v363 = vpop.permute.xlu0 %362
  %366 = vset.pattern.permute.xlu0 0
  %367 = vperm.xlu0 %366, %v118
  %v368 = vpop.permute.xlu0 %367
  %371 = vset.pattern.permute.xlu0 0
  %372 = vperm.xlu0 %371, %v119
  %v373 = vpop.permute.xlu0 %372
  %376 = vset.pattern.permute.xlu0 0
  %377 = vperm.xlu0 %376, %v120
  %v378 = vpop.permute.xlu0 %377
  %381 = vset.pattern.permute.xlu0 0
  %382 = vperm.xlu0 %381, %v121
  %v383 = vpop.permute.xlu0 %382
  %386 = vset.pattern.permute.xlu0 0
  %387 = vperm.xlu0 %386, %v122
  %v388 = vpop.permute.xlu0 %387
  %391 = vset.pattern.permute.xlu0 0
  %392 = vperm.xlu0 %391, %v123
  %v393 = vpop.permute.xlu0 %392
  %396 = vset.pattern.permute.xlu0 0
  %397 = vperm.xlu0 %396, %v124
  %v398 = vpop.permute.xlu0 %397
  %v400 = vmul.f32 %v15, %v128
  %v401 = vmul.f32 %v16, %v133
  %v402 = vmul.f32 %v17, %v138
  %v403 = vmul.f32 %v18, %v143
  %v404 = vmul.f32 %v19, %v148
  %v405 = vmul.f32 %v20, %v153
  %v406 = vmul.f32 %v21, %v158
  %v407 = vmul.f32 %v22, %v163
  %v408 = vmul.f32 %v23, %v168
  %v409 = vmul.f32 %v24, %v173
  %v410 = vmul.f32 %v25, %v178
  %v411 = vmul.f32 %v26, %v183
  %v412 = vmul.f32 %v27, %v188
  %v413 = vmul.f32 %v28, %v193
  %v414 = vmul.f32 %v29, %v198
  %v415 = vmul.f32 %v30, %v203
  %v416 = vmul.f32 %v31, %v208
  %v417 = vmul.f32 %v32, %v213
  %v418 = vmul.f32 %v33, %v218
  %v419 = vmul.f32 %v34, %v223
  %v420 = vmul.f32 %v35, %v228
  %v421 = vmul.f32 %v36, %v233
  %v422 = vmul.f32 %v37, %v238
  %v423 = vmul.f32 %v38, %v243
  %v424 = vmul.f32 %v39, %v248
  %v425 = vmul.f32 %v40, %v253
  %v426 = vmul.f32 %v41, %v258
  %v427 = vmul.f32 %v42, %v263
  %v428 = vmul.f32 %v43, %v268
  %v429 = vmul.f32 %v44, %v273
  %v430 = vmul.f32 %v45, %v278
  %v431 = vmul.f32 %v46, %v283
  %v432 = vmul.f32 %v47, %v288
  %v433 = vmul.f32 %v48, %v293
  %v434 = vmul.f32 %v49, %v298
  %v435 = vmul.f32 %v50, %v303
  %v436 = vmul.f32 %v51, %v308
  %v437 = vmul.f32 %v52, %v313
  %v438 = vmul.f32 %v53, %v318
  %v439 = vmul.f32 %v54, %v323
  %v440 = vmul.f32 %v55, %v328
  %v441 = vmul.f32 %v56, %v333
  %v442 = vmul.f32 %v57, %v338
  %v443 = vmul.f32 %v58, %v343
  %v444 = vmul.f32 %v59, %v348
  %v445 = vmul.f32 %v60, %v353
  %v446 = vmul.f32 %v61, %v358
  %v447 = vmul.f32 %v62, %v363
  %v448 = vmul.f32 %v63, %v368
  %v449 = vmul.f32 %v64, %v373
  %v450 = vmul.f32 %v65, %v378
  %v451 = vmul.f32 %v66, %v383
  %v452 = vmul.f32 %v67, %v388
  %v453 = vmul.f32 %v68, %v393
  %v454 = vmul.f32 %v69, %v398
  %v455 = vld [vmem:[%s2] sm:$0xff]
  %v456 = vld [vmem:[%s2 + $0x8] sm:$0xff]
  %v457 = vld [vmem:[%s2 + $0x10] sm:$0xff]
  %v458 = vld [vmem:[%s2 + $0x18] sm:$0xff]
  %v459 = vld [vmem:[%s2 + $0x20] sm:$0xff]
  %v460 = vld [vmem:[%s2 + $0x28] sm:$0xff]
  %v461 = vld [vmem:[%s2 + $0x30] sm:$0xff]
  %v462 = vld [vmem:[%s2 + $0x38] sm:$0xff]
  %v463 = vld [vmem:[%s2 + $0x40] sm:$0xff]
  %v464 = vld [vmem:[%s2 + $0x48] sm:$0xff]
  %v465 = vld [vmem:[%s2 + $0x50] sm:$0xff]
  %v466 = vld [vmem:[%s2 + $0x58] sm:$0xff]
  %v467 = vld [vmem:[%s2 + $0x60] sm:$0xff]
  %v468 = vld [vmem:[%s2 + $0x68] sm:$0xff]
  %v469 = vld [vmem:[%s2 + $0x70] sm:$0xff]
  %v470 = vld [vmem:[%s2 + $0x78] sm:$0xff]
  %v471 = vld [vmem:[%s2 + $0x80] sm:$0xff]
  %v472 = vld [vmem:[%s2 + $0x88] sm:$0xff]
  %v473 = vld [vmem:[%s2 + $0x90] sm:$0xff]
  %v474 = vld [vmem:[%s2 + $0x98] sm:$0xff]
  %v475 = vld [vmem:[%s2 + $0xa0] sm:$0xff]
  %v476 = vld [vmem:[%s2 + $0xa8] sm:$0xff]
  %v477 = vld [vmem:[%s2 + $0xb0] sm:$0xff]
  %v478 = vld [vmem:[%s2 + $0xb8] sm:$0xff]
  %v479 = vld [vmem:[%s2 + $0xc0] sm:$0xff]
  %v480 = vld [vmem:[%s2 + $0xc8] sm:$0xff]
  %v481 = vld [vmem:[%s2 + $0xd0] sm:$0xff]
  %v482 = vld [vmem:[%s2 + $0xd8] sm:$0xff]
  %v483 = vld [vmem:[%s2 + $0xe0] sm:$0xff]
  %v484 = vld [vmem:[%s2 + $0xe8] sm:$0xff]
  %v485 = vld [vmem:[%s2 + $0xf0] sm:$0xff]
  %v486 = vld [vmem:[%s2 + $0xf8] sm:$0xff]
  %v487 = vld [vmem:[%s2 + $0x100] sm:$0xff]
  %v488 = vld [vmem:[%s2 + $0x108] sm:$0xff]
  %v489 = vld [vmem:[%s2 + $0x110] sm:$0xff]
  %v490 = vld [vmem:[%s2 + $0x118] sm:$0xff]
  %v491 = vld [vmem:[%s2 + $0x120] sm:$0xff]
  %v492 = vld [vmem:[%s2 + $0x128] sm:$0xff]
  %v493 = vld [vmem:[%s2 + $0x130] sm:$0xff]
  %v494 = vld [vmem:[%s2 + $0x138] sm:$0xff]
  %v495 = vld [vmem:[%s2 + $0x140] sm:$0xff]
  %v496 = vld [vmem:[%s2 + $0x148] sm:$0xff]
  %v497 = vld [vmem:[%s2 + $0x150] sm:$0xff]
  %v498 = vld [vmem:[%s2 + $0x158] sm:$0xff]
  %v499 = vld [vmem:[%s2 + $0x160] sm:$0xff]
  %v500 = vld [vmem:[%s2 + $0x168] sm:$0xff]
  %v501 = vld [vmem:[%s2 + $0x170] sm:$0xff]
  %v502 = vld [vmem:[%s2 + $0x178] sm:$0xff]
  %v503 = vld [vmem:[%s2 + $0x180] sm:$0xff]
  %v504 = vld [vmem:[%s2 + $0x188] sm:$0xff]
  %v505 = vld [vmem:[%s2 + $0x190] sm:$0xff]
  %v506 = vld [vmem:[%s2 + $0x198] sm:$0xff]
  %v507 = vld [vmem:[%s2 + $0x1a0] sm:$0xff]
  %v508 = vld [vmem:[%s2 + $0x1a8] sm:$0xff]
  %v509 = vld [vmem:[%s2 + $0x1b0] sm:$0xff]
  %v510 = vld [vmem:[%s2 + $0x1b8] sm:$0xff]
  %v511 = vld [vmem:[%s2 + $0x1c0] sm:$0xff]
  %v512 = vld [vmem:[%s2 + $0x1c8] sm:$0xff]
  %v513 = vld [vmem:[%s2 + $0x1d0] sm:$0xff]
  %v514 = vld [vmem:[%s2 + $0x1d8] sm:$0xff]
  %v515 = vld [vmem:[%s2 + $0x1e0] sm:$0xff]
  %v516 = vld [vmem:[%s2 + $0x1e8] sm:$0xff]
  %v517 = vld [vmem:[%s2 + $0x1f0] sm:$0xff]
  %v518 = vld [vmem:[%s2 + $0x1f8] sm:$0xff]
  %v519 = vld [vmem:[%s2 + $0x200] sm:$0xff]
  %v520 = vld [vmem:[%s2 + $0x208] sm:$0xff]
  %v521 = vld [vmem:[%s2 + $0x210] sm:$0xff]
  %v522 = vld [vmem:[%s2 + $0x218] sm:$0xff]
  %v523 = vld [vmem:[%s2 + $0x220] sm:$0xff]
  %v524 = vld [vmem:[%s2 + $0x228] sm:$0xff]
  %v525 = vld [vmem:[%s2 + $0x230] sm:$0xff]
  %v526 = vld [vmem:[%s2 + $0x238] sm:$0xff]
  %v527 = vld [vmem:[%s2 + $0x240] sm:$0xff]
  %v528 = vld [vmem:[%s2 + $0x248] sm:$0xff]
  %v529 = vld [vmem:[%s2 + $0x250] sm:$0xff]
  %v530 = vld [vmem:[%s2 + $0x258] sm:$0xff]
  %v531 = vld [vmem:[%s2 + $0x260] sm:$0xff]
  %v532 = vld [vmem:[%s2 + $0x268] sm:$0xff]
  %v533 = vld [vmem:[%s2 + $0x270] sm:$0xff]
  %v534 = vld [vmem:[%s2 + $0x278] sm:$0xff]
  %v535 = vld [vmem:[%s2 + $0x280] sm:$0xff]
  %v536 = vld [vmem:[%s2 + $0x288] sm:$0xff]
  %v537 = vld [vmem:[%s2 + $0x290] sm:$0xff]
  %v538 = vld [vmem:[%s2 + $0x298] sm:$0xff]
  %v539 = vld [vmem:[%s2 + $0x2a0] sm:$0xff]
  %v540 = vld [vmem:[%s2 + $0x2a8] sm:$0xff]
  %v541 = vld [vmem:[%s2 + $0x2b0] sm:$0xff]
  %v542 = vld [vmem:[%s2 + $0x2b8] sm:$0xff]
  %v543 = vld [vmem:[%s2 + $0x2c0] sm:$0xff]
  %v544 = vld [vmem:[%s2 + $0x2c8] sm:$0xff]
  %v545 = vld [vmem:[%s2 + $0x2d0] sm:$0xff]
  %v546 = vld [vmem:[%s2 + $0x2d8] sm:$0xff]
  %v547 = vld [vmem:[%s2 + $0x2e0] sm:$0xff]
  %v548 = vld [vmem:[%s2 + $0x2e8] sm:$0xff]
  %v549 = vld [vmem:[%s2 + $0x2f0] sm:$0xff]
  %v550 = vld [vmem:[%s2 + $0x2f8] sm:$0xff]
  %v551 = vld [vmem:[%s2 + $0x300] sm:$0xff]
  %v552 = vld [vmem:[%s2 + $0x308] sm:$0xff]
  %v553 = vld [vmem:[%s2 + $0x310] sm:$0xff]
  %v554 = vld [vmem:[%s2 + $0x318] sm:$0xff]
  %v555 = vld [vmem:[%s2 + $0x320] sm:$0xff]
  %v556 = vld [vmem:[%s2 + $0x328] sm:$0xff]
  %v557 = vld [vmem:[%s2 + $0x330] sm:$0xff]
  %v558 = vld [vmem:[%s2 + $0x338] sm:$0xff]
  %v559 = vld [vmem:[%s2 + $0x340] sm:$0xff]
  %v560 = vld [vmem:[%s2 + $0x348] sm:$0xff]
  %v561 = vld [vmem:[%s2 + $0x350] sm:$0xff]
  %v562 = vld [vmem:[%s2 + $0x358] sm:$0xff]
  %v563 = vld [vmem:[%s2 + $0x360] sm:$0xff]
  %v564 = vld [vmem:[%s2 + $0x368] sm:$0xff]
  %v565 = vpack.c.bf16 %v401, %v400
  %v566 = vpack.c.bf16 %v403, %v402
  %v567 = vpack.c.bf16 %v405, %v404
  %v568 = vpack.c.bf16 %v407, %v406
  %v569 = vpack.c.bf16 %v409, %v408
  %v570 = vpack.c.bf16 %v411, %v410
  %v571 = vpack.c.bf16 %v413, %v412
  %v572 = vpack.c.bf16 %v415, %v414
  %v573 = vpack.c.bf16 %v417, %v416
  %v574 = vpack.c.bf16 %v419, %v418
  %v575 = vpack.c.bf16 %v421, %v420
  %v576 = vpack.c.bf16 %v423, %v422
  %v577 = vpack.c.bf16 %v425, %v424
  %v578 = vpack.c.bf16 %v427, %v426
  %v579 = vpack.c.bf16 %v429, %v428
  %v580 = vpack.c.bf16 %v431, %v430
  %v581 = vpack.c.bf16 %v433, %v432
  %v582 = vpack.c.bf16 %v435, %v434
  %v583 = vpack.c.bf16 %v437, %v436
  %v584 = vpack.c.bf16 %v439, %v438
  %v585 = vpack.c.bf16 %v441, %v440
  %v586 = vpack.c.bf16 %v443, %v442
  %v587 = vpack.c.bf16 %v445, %v444
  %v588 = vpack.c.bf16 %v447, %v446
  %v589 = vpack.c.bf16 %v449, %v448
  %v590 = vpack.c.bf16 %v451, %v450
  %v591 = vpack.c.bf16 %v453, %v452
  %v592 = vpack.c.bf16 %v454, %v454
  %v703 = vunpack.c.l.b16 %v455
  %v704 = vunpack.c.h.b16 %v455
  %v705 = vunpack.c.l.b16 %v456
  %v706 = vunpack.c.h.b16 %v456
  %v707 = vunpack.c.l.b16 %v457
  %v708 = vunpack.c.h.b16 %v457
  %v709 = vunpack.c.l.b16 %v458
  %v710 = vunpack.c.h.b16 %v458
  %v711 = vunpack.c.l.b16 %v459
  %v712 = vunpack.c.h.b16 %v459
  %v713 = vunpack.c.l.b16 %v460
  %v714 = vunpack.c.h.b16 %v460
  %v715 = vunpack.c.l.b16 %v461
  %v716 = vunpack.c.h.b16 %v461
  %v717 = vunpack.c.l.b16 %v462
  %v718 = vunpack.c.h.b16 %v462
  %v719 = vunpack.c.l.b16 %v463
  %v720 = vunpack.c.h.b16 %v463
  %v721 = vunpack.c.l.b16 %v464
  %v722 = vunpack.c.h.b16 %v464
  %v723 = vunpack.c.l.b16 %v465
  %v724 = vunpack.c.h.b16 %v465
  %v725 = vunpack.c.l.b16 %v466
  %v726 = vunpack.c.h.b16 %v466
  %v727 = vunpack.c.l.b16 %v467
  %v728 = vunpack.c.h.b16 %v467
  %v729 = vunpack.c.l.b16 %v468
  %v730 = vunpack.c.h.b16 %v468
  %v731 = vunpack.c.l.b16 %v469
  %v732 = vunpack.c.h.b16 %v469
  %v733 = vunpack.c.l.b16 %v470
  %v734 = vunpack.c.h.b16 %v470
  %v735 = vunpack.c.l.b16 %v471
  %v736 = vunpack.c.h.b16 %v471
  %v737 = vunpack.c.l.b16 %v472
  %v738 = vunpack.c.h.b16 %v472
  %v739 = vunpack.c.l.b16 %v473
  %v740 = vunpack.c.h.b16 %v473
  %v741 = vunpack.c.l.b16 %v474
  %v742 = vunpack.c.h.b16 %v474
  %v743 = vunpack.c.l.b16 %v475
  %v744 = vunpack.c.h.b16 %v475
  %v745 = vunpack.c.l.b16 %v476
  %v746 = vunpack.c.h.b16 %v476
  %v747 = vunpack.c.l.b16 %v477
  %v748 = vunpack.c.h.b16 %v477
  %v749 = vunpack.c.l.b16 %v478
  %v750 = vunpack.c.h.b16 %v478
  %v751 = vunpack.c.l.b16 %v479
  %v752 = vunpack.c.h.b16 %v479
  %v753 = vunpack.c.l.b16 %v480
  %v754 = vunpack.c.h.b16 %v480
  %v755 = vunpack.c.l.b16 %v481
  %v756 = vunpack.c.h.b16 %v481
  %v757 = vunpack.c.l.b16 %v482
  %v758 = vunpack.c.h.b16 %v482
  %v759 = vunpack.c.l.b16 %v483
  %v760 = vunpack.c.h.b16 %v483
  %v761 = vunpack.c.l.b16 %v484
  %v762 = vunpack.c.h.b16 %v484
  %v763 = vunpack.c.l.b16 %v485
  %v764 = vunpack.c.h.b16 %v485
  %v765 = vunpack.c.l.b16 %v486
  %v766 = vunpack.c.h.b16 %v486
  %v767 = vunpack.c.l.b16 %v487
  %v768 = vunpack.c.h.b16 %v487
  %v769 = vunpack.c.l.b16 %v488
  %v770 = vunpack.c.h.b16 %v488
  %v771 = vunpack.c.l.b16 %v489
  %v772 = vunpack.c.h.b16 %v489
  %v773 = vunpack.c.l.b16 %v490
  %v774 = vunpack.c.h.b16 %v490
  %v775 = vunpack.c.l.b16 %v491
  %v776 = vunpack.c.h.b16 %v491
  %v777 = vunpack.c.l.b16 %v492
  %v778 = vunpack.c.h.b16 %v492
  %v779 = vunpack.c.l.b16 %v493
  %v780 = vunpack.c.h.b16 %v493
  %v781 = vunpack.c.l.b16 %v494
  %v782 = vunpack.c.h.b16 %v494
  %v783 = vunpack.c.l.b16 %v495
  %v784 = vunpack.c.h.b16 %v495
  %v785 = vunpack.c.l.b16 %v496
  %v786 = vunpack.c.h.b16 %v496
  %v787 = vunpack.c.l.b16 %v497
  %v788 = vunpack.c.h.b16 %v497
  %v789 = vunpack.c.l.b16 %v498
  %v790 = vunpack.c.h.b16 %v498
  %v791 = vunpack.c.l.b16 %v499
  %v792 = vunpack.c.h.b16 %v499
  %v793 = vunpack.c.l.b16 %v500
  %v794 = vunpack.c.h.b16 %v500
  %v795 = vunpack.c.l.b16 %v501
  %v796 = vunpack.c.h.b16 %v501
  %v797 = vunpack.c.l.b16 %v502
  %v798 = vunpack.c.h.b16 %v502
  %v799 = vunpack.c.l.b16 %v503
  %v800 = vunpack.c.h.b16 %v503
  %v801 = vunpack.c.l.b16 %v504
  %v802 = vunpack.c.h.b16 %v504
  %v803 = vunpack.c.l.b16 %v505
  %v804 = vunpack.c.h.b16 %v505
  %v805 = vunpack.c.l.b16 %v506
  %v806 = vunpack.c.h.b16 %v506
  %v807 = vunpack.c.l.b16 %v507
  %v808 = vunpack.c.h.b16 %v507
  %v809 = vunpack.c.l.b16 %v508
  %v810 = vunpack.c.h.b16 %v508
  %v811 = vunpack.c.l.b16 %v509
  %v812 = vunpack.c.h.b16 %v509
  %v813 = vunpack.c.l.b16 %v510
  %v814 = vunpack.c.h.b16 %v510
  %v815 = vunpack.c.l.b16 %v511
  %v816 = vunpack.c.h.b16 %v511
  %v817 = vunpack.c.l.b16 %v512
  %v818 = vunpack.c.h.b16 %v512
  %v819 = vunpack.c.l.b16 %v513
  %v820 = vunpack.c.h.b16 %v513
  %v821 = vunpack.c.l.b16 %v514
  %v822 = vunpack.c.h.b16 %v514
  %v823 = vunpack.c.l.b16 %v515
  %v824 = vunpack.c.h.b16 %v515
  %v825 = vunpack.c.l.b16 %v516
  %v826 = vunpack.c.h.b16 %v516
  %v827 = vunpack.c.l.b16 %v517
  %v828 = vunpack.c.h.b16 %v517
  %v829 = vunpack.c.l.b16 %v518
  %v830 = vunpack.c.h.b16 %v518
  %v831 = vunpack.c.l.b16 %v519
  %v832 = vunpack.c.h.b16 %v519
  %v833 = vunpack.c.l.b16 %v520
  %v834 = vunpack.c.h.b16 %v520
  %v835 = vunpack.c.l.b16 %v521
  %v836 = vunpack.c.h.b16 %v521
  %v837 = vunpack.c.l.b16 %v522
  %v838 = vunpack.c.h.b16 %v522
  %v839 = vunpack.c.l.b16 %v523
  %v840 = vunpack.c.h.b16 %v523
  %v841 = vunpack.c.l.b16 %v524
  %v842 = vunpack.c.h.b16 %v524
  %v843 = vunpack.c.l.b16 %v525
  %v844 = vunpack.c.h.b16 %v525
  %v845 = vunpack.c.l.b16 %v526
  %v846 = vunpack.c.h.b16 %v526
  %v847 = vunpack.c.l.b16 %v527
  %v848 = vunpack.c.h.b16 %v527
  %v849 = vunpack.c.l.b16 %v528
  %v850 = vunpack.c.h.b16 %v528
  %v851 = vunpack.c.l.b16 %v529
  %v852 = vunpack.c.h.b16 %v529
  %v853 = vunpack.c.l.b16 %v530
  %v854 = vunpack.c.h.b16 %v530
  %v855 = vunpack.c.l.b16 %v531
  %v856 = vunpack.c.h.b16 %v531
  %v857 = vunpack.c.l.b16 %v532
  %v858 = vunpack.c.h.b16 %v532
  %v859 = vunpack.c.l.b16 %v533
  %v860 = vunpack.c.h.b16 %v533
  %v861 = vunpack.c.l.b16 %v534
  %v862 = vunpack.c.h.b16 %v534
  %v863 = vunpack.c.l.b16 %v535
  %v864 = vunpack.c.h.b16 %v535
  %v865 = vunpack.c.l.b16 %v536
  %v866 = vunpack.c.h.b16 %v536
  %v867 = vunpack.c.l.b16 %v537
  %v868 = vunpack.c.h.b16 %v537
  %v869 = vunpack.c.l.b16 %v538
  %v870 = vunpack.c.h.b16 %v538
  %v871 = vunpack.c.l.b16 %v539
  %v872 = vunpack.c.h.b16 %v539
  %v873 = vunpack.c.l.b16 %v540
  %v874 = vunpack.c.h.b16 %v540
  %v875 = vunpack.c.l.b16 %v541
  %v876 = vunpack.c.h.b16 %v541
  %v877 = vunpack.c.l.b16 %v542
  %v878 = vunpack.c.h.b16 %v542
  %v879 = vunpack.c.l.b16 %v543
  %v880 = vunpack.c.h.b16 %v543
  %v881 = vunpack.c.l.b16 %v544
  %v882 = vunpack.c.h.b16 %v544
  %v883 = vunpack.c.l.b16 %v545
  %v884 = vunpack.c.h.b16 %v545
  %v885 = vunpack.c.l.b16 %v546
  %v886 = vunpack.c.h.b16 %v546
  %v887 = vunpack.c.l.b16 %v547
  %v888 = vunpack.c.h.b16 %v547
  %v889 = vunpack.c.l.b16 %v548
  %v890 = vunpack.c.h.b16 %v548
  %v891 = vunpack.c.l.b16 %v549
  %v892 = vunpack.c.h.b16 %v549
  %v893 = vunpack.c.l.b16 %v550
  %v894 = vunpack.c.h.b16 %v550
  %v895 = vunpack.c.l.b16 %v551
  %v896 = vunpack.c.h.b16 %v551
  %v897 = vunpack.c.l.b16 %v552
  %v898 = vunpack.c.h.b16 %v552
  %v899 = vunpack.c.l.b16 %v553
  %v900 = vunpack.c.h.b16 %v553
  %v901 = vunpack.c.l.b16 %v554
  %v902 = vunpack.c.h.b16 %v554
  %v903 = vunpack.c.l.b16 %v555
  %v904 = vunpack.c.h.b16 %v555
  %v905 = vunpack.c.l.b16 %v556
  %v906 = vunpack.c.h.b16 %v556
  %v907 = vunpack.c.l.b16 %v557
  %v908 = vunpack.c.h.b16 %v557
  %v909 = vunpack.c.l.b16 %v558
  %v910 = vunpack.c.h.b16 %v558
  %v911 = vunpack.c.l.b16 %v559
  %v912 = vunpack.c.h.b16 %v559
  %v913 = vunpack.c.l.b16 %v560
  %v914 = vunpack.c.h.b16 %v560
  %v915 = vunpack.c.l.b16 %v561
  %v916 = vunpack.c.h.b16 %v561
  %v917 = vunpack.c.l.b16 %v562
  %v918 = vunpack.c.h.b16 %v562
  %v919 = vunpack.c.l.b16 %v563
  %v920 = vunpack.c.h.b16 %v563
  %v921 = vunpack.c.l.b16 %v564
  %v922 = vunpack.c.h.b16 %v564
  %v923 = vpack.c.b16 %v707, %v703
  %v924 = vpack.c.b16 %v708, %v704
  %v925 = vpack.c.b16 %v709, %v705
  %v926 = vpack.c.b16 %v710, %v706
  %v927 = vpack.c.b16 %v715, %v711
  %v928 = vpack.c.b16 %v716, %v712
  %v929 = vpack.c.b16 %v717, %v713
  %v930 = vpack.c.b16 %v718, %v714
  %v931 = vpack.c.b16 %v723, %v719
  %v932 = vpack.c.b16 %v724, %v720
  %v933 = vpack.c.b16 %v725, %v721
  %v934 = vpack.c.b16 %v726, %v722
  %v935 = vpack.c.b16 %v731, %v727
  %v936 = vpack.c.b16 %v732, %v728
  %v937 = vpack.c.b16 %v733, %v729
  %v938 = vpack.c.b16 %v734, %v730
  %v939 = vpack.c.b16 %v739, %v735
  %v940 = vpack.c.b16 %v740, %v736
  %v941 = vpack.c.b16 %v741, %v737
  %v942 = vpack.c.b16 %v742, %v738
  %v943 = vpack.c.b16 %v747, %v743
  %v944 = vpack.c.b16 %v748, %v744
  %v945 = vpack.c.b16 %v749, %v745
  %v946 = vpack.c.b16 %v750, %v746
  %v947 = vpack.c.b16 %v755, %v751
  %v948 = vpack.c.b16 %v756, %v752
  %v949 = vpack.c.b16 %v757, %v753
  %v950 = vpack.c.b16 %v758, %v754
  %v951 = vpack.c.b16 %v763, %v759
  %v952 = vpack.c.b16 %v764, %v760
  %v953 = vpack.c.b16 %v765, %v761
  %v954 = vpack.c.b16 %v766, %v762
  %v955 = vpack.c.b16 %v771, %v767
  %v956 = vpack.c.b16 %v772, %v768
  %v957 = vpack.c.b16 %v773, %v769
  %v958 = vpack.c.b16 %v774, %v770
  %v959 = vpack.c.b16 %v779, %v775
  %v960 = vpack.c.b16 %v780, %v776
  %v961 = vpack.c.b16 %v781, %v777
  %v962 = vpack.c.b16 %v782, %v778
  %v963 = vpack.c.b16 %v787, %v783
  %v964 = vpack.c.b16 %v788, %v784
  %v965 = vpack.c.b16 %v789, %v785
  %v966 = vpack.c.b16 %v790, %v786
  %v967 = vpack.c.b16 %v795, %v791
  %v968 = vpack.c.b16 %v796, %v792
  %v969 = vpack.c.b16 %v797, %v793
  %v970 = vpack.c.b16 %v798, %v794
  %v971 = vpack.c.b16 %v803, %v799
  %v972 = vpack.c.b16 %v804, %v800
  %v973 = vpack.c.b16 %v805, %v801
  %v974 = vpack.c.b16 %v806, %v802
  %v975 = vpack.c.b16 %v811, %v807
  %v976 = vpack.c.b16 %v812, %v808
  %v977 = vpack.c.b16 %v813, %v809
  %v978 = vpack.c.b16 %v814, %v810
  %v979 = vpack.c.b16 %v819, %v815
  %v980 = vpack.c.b16 %v820, %v816
  %v981 = vpack.c.b16 %v821, %v817
  %v982 = vpack.c.b16 %v822, %v818
  %v983 = vpack.c.b16 %v827, %v823
  %v984 = vpack.c.b16 %v828, %v824
  %v985 = vpack.c.b16 %v829, %v825
  %v986 = vpack.c.b16 %v830, %v826
  %v987 = vpack.c.b16 %v835, %v831
  %v988 = vpack.c.b16 %v836, %v832
  %v989 = vpack.c.b16 %v837, %v833
  %v990 = vpack.c.b16 %v838, %v834
  %v991 = vpack.c.b16 %v843, %v839
  %v992 = vpack.c.b16 %v844, %v840
  %v993 = vpack.c.b16 %v845, %v841
  %v994 = vpack.c.b16 %v846, %v842
  %v995 = vpack.c.b16 %v851, %v847
  %v996 = vpack.c.b16 %v852, %v848
  %v997 = vpack.c.b16 %v853, %v849
  %v998 = vpack.c.b16 %v854, %v850
  %v999 = vpack.c.b16 %v859, %v855
  %v1000 = vpack.c.b16 %v860, %v856
  %v1001 = vpack.c.b16 %v861, %v857
  %v1002 = vpack.c.b16 %v862, %v858
  %v1003 = vpack.c.b16 %v867, %v863
  %v1004 = vpack.c.b16 %v868, %v864
  %v1005 = vpack.c.b16 %v869, %v865
  %v1006 = vpack.c.b16 %v870, %v866
  %v1007 = vpack.c.b16 %v875, %v871
  %v1008 = vpack.c.b16 %v876, %v872
  %v1009 = vpack.c.b16 %v877, %v873
  %v1010 = vpack.c.b16 %v878, %v874
  %v1011 = vpack.c.b16 %v883, %v879
  %v1012 = vpack.c.b16 %v884, %v880
  %v1013 = vpack.c.b16 %v885, %v881
  %v1014 = vpack.c.b16 %v886, %v882
  %v1015 = vpack.c.b16 %v891, %v887
  %v1016 = vpack.c.b16 %v892, %v888
  %v1017 = vpack.c.b16 %v893, %v889
  %v1018 = vpack.c.b16 %v894, %v890
  %v1019 = vpack.c.b16 %v899, %v895
  %v1020 = vpack.c.b16 %v900, %v896
  %v1021 = vpack.c.b16 %v901, %v897
  %v1022 = vpack.c.b16 %v902, %v898
  %v1023 = vpack.c.b16 %v907, %v903
  %v1024 = vpack.c.b16 %v908, %v904
  %v1025 = vpack.c.b16 %v909, %v905
  %v1026 = vpack.c.b16 %v910, %v906
  %v1027 = vpack.c.b16 %v915, %v911
  %v1028 = vpack.c.b16 %v916, %v912
  %v1029 = vpack.c.b16 %v917, %v913
  %v1030 = vpack.c.b16 %v918, %v914
  %v1031 = vpack.c.b16 %v919, %v919
  %v1032 = vpack.c.b16 %v920, %v920
  %v1033 = vpack.c.b16 %v921, %v921
  %v1034 = vpack.c.b16 %v922, %v922
  %vm1119 = vcmask 457728
  %v1121 = vsel %vm1119, %v926, 0
  %v1124 = vsel %vm1119, %v930, 0
  %v1127 = vsel %vm1119, %v934, 0
  %v1130 = vsel %vm1119, %v938, 0
  %v1133 = vsel %vm1119, %v942, 0
  %v1136 = vsel %vm1119, %v946, 0
  %v1139 = vsel %vm1119, %v950, 0
  %v1142 = vsel %vm1119, %v954, 0
  %v1145 = vsel %vm1119, %v958, 0
  %v1148 = vsel %vm1119, %v962, 0
  %v1151 = vsel %vm1119, %v966, 0
  %v1154 = vsel %vm1119, %v970, 0
  %v1157 = vsel %vm1119, %v974, 0
  %v1160 = vsel %vm1119, %v978, 0
  %v1163 = vsel %vm1119, %v982, 0
  %v1166 = vsel %vm1119, %v986, 0
  %v1169 = vsel %vm1119, %v990, 0
  %v1172 = vsel %vm1119, %v994, 0
  %v1175 = vsel %vm1119, %v998, 0
  %v1178 = vsel %vm1119, %v1002, 0
  %v1181 = vsel %vm1119, %v1006, 0
  %v1184 = vsel %vm1119, %v1010, 0
  %v1187 = vsel %vm1119, %v1014, 0
  %v1190 = vsel %vm1119, %v1018, 0
  %v1193 = vsel %vm1119, %v1022, 0
  %v1196 = vsel %vm1119, %v1026, 0
  %v1199 = vsel %vm1119, %v1030, 0
  %v1202 = vsel %vm1119, %v1034, 0
  %vm1204 = vcmask 1043456
  %v1206 = vsel %vm1204, %v592, 0
  %1208 = vmatprep.subr.bf16.mxu0 0
  %1209 = vmatpush1.bf16.msra.mxu0 %v565
  %1210 = vmatprep.subr.bf16.mxu0 0
  %1211 = vmatpush1.bf16.msra.mxu0 %v566
  %1212 = vmatprep.subr.bf16.mxu0 0
  %1213 = vmatpush1.bf16.msra.mxu0 %v567
  %1214 = vmatprep.subr.bf16.mxu0 0
  %1215 = vmatpush1.bf16.msra.mxu0 %v568
  %1216 = vmatprep.subr.bf16.mxu0 0
  %1217 = vmatpush1.bf16.msra.mxu0 %v569
  %1218 = vmatprep.subr.bf16.mxu0 0
  %1219 = vmatpush1.bf16.msra.mxu0 %v570
  %1220 = vmatprep.subr.bf16.mxu0 0
  %1221 = vmatpush1.bf16.msra.mxu0 %v571
  %1222 = vmatprep.subr.bf16.mxu0 0
  %1223 = vmatpush1.bf16.msra.mxu0 %v572
  %1224 = vmatprep.subr.bf16.mxu0 0
  %1225 = vmatpush1.bf16.msra.mxu0 %v573
  %1226 = vmatprep.subr.bf16.mxu0 0
  %1227 = vmatpush1.bf16.msra.mxu0 %v574
  %1228 = vmatprep.subr.bf16.mxu0 0
  %1229 = vmatpush1.bf16.msra.mxu0 %v575
  %1230 = vmatprep.subr.bf16.mxu0 0
  %1231 = vmatpush1.bf16.msra.mxu0 %v576
  %1232 = vmatprep.subr.bf16.mxu0 0
  %1233 = vmatpush1.bf16.msra.mxu0 %v577
  %1234 = vmatprep.subr.bf16.mxu0 0
  %1235 = vmatpush1.bf16.msra.mxu0 %v578
  %1236 = vmatprep.subr.bf16.mxu0 0
  %1237 = vmatpush1.bf16.msra.mxu0 %v579
  %1238 = vmatprep.subr.bf16.mxu0 0
  %1239 = vmatpush1.bf16.msra.mxu0 %v580
  %1240 = vmatprep.mubr.bf16.mxu0 %v924
  %1241 = vmatmul.mubr.bf16.gmra.mrb[0].mxu0 %v923
  %v1242 = vpop.f32.mrb[0].mxu0
  %v1243 = vadd.f32 0.0, %v1242
  %v1244 = vpop.f32.mrb[0].mxu0
  %v1245 = vpop.f32.mrb[0].mxu0
  %v1246 = vadd.f32 0.0, %v1245
  %v1247 = vpop.f32.mrb[0].mxu0
  %1248 = vmatprep.mubr.bf16.mxu0 %v928
  %1249 = vmatmul.mubr.bf16.gmra.mrb[0].mxu0 %v927
  %v1250 = vpop.f32.mrb[0].mxu0
  %v1251 = vadd.f32 0.0, %v1250
  %v1252 = vpop.f32.mrb[0].mxu0
  %v1253 = vpop.f32.mrb[0].mxu0
  %v1254 = vadd.f32 0.0, %v1253
  %v1255 = vpop.f32.mrb[0].mxu0
  %1256 = vmatprep.mubr.bf16.mxu0 %v932
  %1257 = vmatmul.mubr.bf16.gmra.mrb[0].mxu0 %v931
  %v1258 = vpop.f32.mrb[0].mxu0
  %v1259 = vadd.f32 0.0, %v1258
  %v1260 = vpop.f32.mrb[0].mxu0
  %v1261 = vpop.f32.mrb[0].mxu0
  %v1262 = vadd.f32 0.0, %v1261
  %v1263 = vpop.f32.mrb[0].mxu0
  %1264 = vmatprep.mubr.bf16.mxu0 %v936
  %1265 = vmatmul.mubr.bf16.gmra.mrb[0].mxu0 %v935
  %v1266 = vpop.f32.mrb[0].mxu0
  %v1267 = vadd.f32 0.0, %v1266
  %v1268 = vpop.f32.mrb[0].mxu0
  %v1269 = vpop.f32.mrb[0].mxu0
  %v1270 = vadd.f32 0.0, %v1269
  %v1271 = vpop.f32.mrb[0].mxu0
  %1272 = vmatprep.mubr.bf16.mxu0 %v940
  %1273 = vmatmul.mubr.bf16.gmra.mrb[0].mxu0 %v939
  %v1274 = vpop.f32.mrb[0].mxu0
  %v1275 = vadd.f32 0.0, %v1274
  %v1276 = vpop.f32.mrb[0].mxu0
  %v1277 = vpop.f32.mrb[0].mxu0
  %v1278 = vadd.f32 0.0, %v1277
  %v1279 = vpop.f32.mrb[0].mxu0
  %1280 = vmatprep.mubr.bf16.mxu0 %v944
  %1281 = vmatmul.mubr.bf16.gmra.mrb[0].mxu0 %v943
  %v1282 = vpop.f32.mrb[0].mxu0
  %v1283 = vadd.f32 0.0, %v1282
  %v1284 = vpop.f32.mrb[0].mxu0
  %v1285 = vpop.f32.mrb[0].mxu0
  %v1286 = vadd.f32 0.0, %v1285
  %v1287 = vpop.f32.mrb[0].mxu0
  %1288 = vmatprep.mubr.bf16.mxu0 %v948
  %1289 = vmatmul.mubr.bf16.gmra.mrb[0].mxu0 %v947
  %v1290 = vpop.f32.mrb[0].mxu0
  %v1291 = vadd.f32 0.0, %v1290
  %v1292 = vpop.f32.mrb[0].mxu0
  %v1293 = vpop.f32.mrb[0].mxu0
  %v1294 = vadd.f32 0.0, %v1293
  %v1295 = vpop.f32.mrb[0].mxu0
  %1296 = vmatprep.mubr.bf16.mxu0 %v952
  %1297 = vmatmul.mubr.bf16.gmra.mrb[0].mxu0 %v951
  %v1298 = vpop.f32.mrb[0].mxu0
  %v1299 = vadd.f32 0.0, %v1298
  %v1300 = vpop.f32.mrb[0].mxu0
  %v1301 = vpop.f32.mrb[0].mxu0
  %v1302 = vadd.f32 0.0, %v1301
  %v1303 = vpop.f32.mrb[0].mxu0
  %1304 = vmatprep.mubr.bf16.mxu0 %v956
  %1305 = vmatmul.mubr.bf16.gmra.mrb[0].mxu0 %v955
  %v1306 = vpop.f32.mrb[0].mxu0
  %v1307 = vadd.f32 0.0, %v1306
  %v1308 = vpop.f32.mrb[0].mxu0
  %v1309 = vpop.f32.mrb[0].mxu0
  %v1310 = vadd.f32 0.0, %v1309
  %v1311 = vpop.f32.mrb[0].mxu0
  %1312 = vmatprep.mubr.bf16.mxu0 %v960
  %1313 = vmatmul.mubr.bf16.gmra.mrb[0].mxu0 %v959
  %v1314 = vpop.f32.mrb[0].mxu0
  %v1315 = vadd.f32 0.0, %v1314
  %v1316 = vpop.f32.mrb[0].mxu0
  %v1317 = vpop.f32.mrb[0].mxu0
  %v1318 = vadd.f32 0.0, %v1317
  %v1319 = vpop.f32.mrb[0].mxu0
  %1320 = vmatprep.mubr.bf16.mxu0 %v964
  %1321 = vmatmul.mubr.bf16.gmra.mrb[0].mxu0 %v963
  %v1322 = vpop.f32.mrb[0].mxu0
  %v1323 = vadd.f32 0.0, %v1322
  %v1324 = vpop.f32.mrb[0].mxu0
  %v1325 = vpop.f32.mrb[0].mxu0
  %v1326 = vadd.f32 0.0, %v1325
  %v1327 = vpop.f32.mrb[0].mxu0
  %1328 = vmatprep.mubr.bf16.mxu0 %v968
  %1329 = vmatmul.mubr.bf16.gmra.mrb[0].mxu0 %v967
  %v1330 = vpop.f32.mrb[0].mxu0
  %v1331 = vadd.f32 0.0, %v1330
  %v1332 = vpop.f32.mrb[0].mxu0
  %v1333 = vpop.f32.mrb[0].mxu0
  %v1334 = vadd.f32 0.0, %v1333
  %v1335 = vpop.f32.mrb[0].mxu0
  %1336 = vmatprep.mubr.bf16.mxu0 %v972
  %1337 = vmatmul.mubr.bf16.gmra.mrb[0].mxu0 %v971
  %v1338 = vpop.f32.mrb[0].mxu0
  %v1339 = vadd.f32 0.0, %v1338
  %v1340 = vpop.f32.mrb[0].mxu0
  %v1341 = vpop.f32.mrb[0].mxu0
  %v1342 = vadd.f32 0.0, %v1341
  %v1343 = vpop.f32.mrb[0].mxu0
  %1344 = vmatprep.mubr.bf16.mxu0 %v976
  %1345 = vmatmul.mubr.bf16.gmra.mrb[0].mxu0 %v975
  %v1346 = vpop.f32.mrb[0].mxu0
  %v1347 = vadd.f32 0.0, %v1346
  %v1348 = vpop.f32.mrb[0].mxu0
  %v1349 = vpop.f32.mrb[0].mxu0
  %v1350 = vadd.f32 0.0, %v1349
  %v1351 = vpop.f32.mrb[0].mxu0
  %1352 = vmatprep.mubr.bf16.mxu0 %v980
  %1353 = vmatmul.mubr.bf16.gmra.mrb[0].mxu0 %v979
  %v1354 = vpop.f32.mrb[0].mxu0
  %v1355 = vadd.f32 0.0, %v1354
  %v1356 = vpop.f32.mrb[0].mxu0
  %v1357 = vpop.f32.mrb[0].mxu0
  %v1358 = vadd.f32 0.0, %v1357
  %v1359 = vpop.f32.mrb[0].mxu0
  %1360 = vmatprep.mubr.bf16.mxu0 %v984
  %1361 = vmatmul.mubr.bf16.gmra.mrb[0].mxu0 %v983
  %v1362 = vpop.f32.mrb[0].mxu0
  %v1363 = vadd.f32 0.0, %v1362
  %v1364 = vpop.f32.mrb[0].mxu0
  %v1365 = vpop.f32.mrb[0].mxu0
  %v1366 = vadd.f32 0.0, %v1365
  %v1367 = vpop.f32.mrb[0].mxu0
  %1368 = vmatprep.mubr.bf16.mxu0 %v988
  %1369 = vmatmul.mubr.bf16.gmra.mrb[0].mxu0 %v987
  %v1370 = vpop.f32.mrb[0].mxu0
  %v1371 = vadd.f32 0.0, %v1370
  %v1372 = vpop.f32.mrb[0].mxu0
  %v1373 = vpop.f32.mrb[0].mxu0
  %v1374 = vadd.f32 0.0, %v1373
  %v1375 = vpop.f32.mrb[0].mxu0
  %1376 = vmatprep.mubr.bf16.mxu0 %v992
  %1377 = vmatmul.mubr.bf16.gmra.mrb[0].mxu0 %v991
  %v1378 = vpop.f32.mrb[0].mxu0
  %v1379 = vadd.f32 0.0, %v1378
  %v1380 = vpop.f32.mrb[0].mxu0
  %v1381 = vpop.f32.mrb[0].mxu0
  %v1382 = vadd.f32 0.0, %v1381
  %v1383 = vpop.f32.mrb[0].mxu0
  %1384 = vmatprep.mubr.bf16.mxu0 %v996
  %1385 = vmatmul.mubr.bf16.gmra.mrb[0].mxu0 %v995
  %v1386 = vpop.f32.mrb[0].mxu0
  %v1387 = vadd.f32 0.0, %v1386
  %v1388 = vpop.f32.mrb[0].mxu0
  %v1389 = vpop.f32.mrb[0].mxu0
  %v1390 = vadd.f32 0.0, %v1389
  %v1391 = vpop.f32.mrb[0].mxu0
  %1392 = vmatprep.mubr.bf16.mxu0 %v1000
  %1393 = vmatmul.mubr.bf16.gmra.mrb[0].mxu0 %v999
  %v1394 = vpop.f32.mrb[0].mxu0
  %v1395 = vadd.f32 0.0, %v1394
  %v1396 = vpop.f32.mrb[0].mxu0
  %v1397 = vpop.f32.mrb[0].mxu0
  %v1398 = vadd.f32 0.0, %v1397
  %v1399 = vpop.f32.mrb[0].mxu0
  %1400 = vmatprep.mubr.bf16.mxu0 %v1004
  %1401 = vmatmul.mubr.bf16.gmra.mrb[0].mxu0 %v1003
  %v1402 = vpop.f32.mrb[0].mxu0
  %v1403 = vadd.f32 0.0, %v1402
  %v1404 = vpop.f32.mrb[0].mxu0
  %v1405 = vpop.f32.mrb[0].mxu0
  %v1406 = vadd.f32 0.0, %v1405
  %v1407 = vpop.f32.mrb[0].mxu0
  %1408 = vmatprep.mubr.bf16.mxu0 %v1008
  %1409 = vmatmul.mubr.bf16.gmra.mrb[0].mxu0 %v1007
  %v1410 = vpop.f32.mrb[0].mxu0
  %v1411 = vadd.f32 0.0, %v1410
  %v1412 = vpop.f32.mrb[0].mxu0
  %v1413 = vpop.f32.mrb[0].mxu0
  %v1414 = vadd.f32 0.0, %v1413
  %v1415 = vpop.f32.mrb[0].mxu0
  %1416 = vmatprep.mubr.bf16.mxu0 %v1012
  %1417 = vmatmul.mubr.bf16.gmra.mrb[0].mxu0 %v1011
  %v1418 = vpop.f32.mrb[0].mxu0
  %v1419 = vadd.f32 0.0, %v1418
  %v1420 = vpop.f32.mrb[0].mxu0
  %v1421 = vpop.f32.mrb[0].mxu0
  %v1422 = vadd.f32 0.0, %v1421
  %v1423 = vpop.f32.mrb[0].mxu0
  %1424 = vmatprep.mubr.bf16.mxu0 %v1016
  %1425 = vmatmul.mubr.bf16.gmra.mrb[0].mxu0 %v1015
  %v1426 = vpop.f32.mrb[0].mxu0
  %v1427 = vadd.f32 0.0, %v1426
  %v1428 = vpop.f32.mrb[0].mxu0
  %v1429 = vpop.f32.mrb[0].mxu0
  %v1430 = vadd.f32 0.0, %v1429
  %v1431 = vpop.f32.mrb[0].mxu0
  %1432 = vmatprep.mubr.bf16.mxu0 %v1020
  %1433 = vmatmul.mubr.bf16.gmra.mrb[0].mxu0 %v1019
  %v1434 = vpop.f32.mrb[0].mxu0
  %v1435 = vadd.f32 0.0, %v1434
  %v1436 = vpop.f32.mrb[0].mxu0
  %v1437 = vpop.f32.mrb[0].mxu0
  %v1438 = vadd.f32 0.0, %v1437
  %v1439 = vpop.f32.mrb[0].mxu0
  %1440 = vmatprep.mubr.bf16.mxu0 %v1024
  %1441 = vmatmul.mubr.bf16.gmra.mrb[0].mxu0 %v1023
  %v1442 = vpop.f32.mrb[0].mxu0
  %v1443 = vadd.f32 0.0, %v1442
  %v1444 = vpop.f32.mrb[0].mxu0
  %v1445 = vpop.f32.mrb[0].mxu0
  %v1446 = vadd.f32 0.0, %v1445
  %v1447 = vpop.f32.mrb[0].mxu0
  %1448 = vmatprep.mubr.bf16.mxu0 %v1028
  %1449 = vmatmul.mubr.bf16.gmra.mrb[0].mxu0 %v1027
  %v1450 = vpop.f32.mrb[0].mxu0
  %v1451 = vadd.f32 0.0, %v1450
  %v1452 = vpop.f32.mrb[0].mxu0
  %v1453 = vpop.f32.mrb[0].mxu0
  %v1454 = vadd.f32 0.0, %v1453
  %v1455 = vpop.f32.mrb[0].mxu0
  %1456 = vmatprep.mubr.bf16.mxu0 %v1032
  %1457 = vmatmul.mubr.bf16.gmra.mrb[0].mxu0 %v1031
  %v1458 = vpop.f32.mrb[0].mxu0
  %v1459 = vadd.f32 0.0, %v1458
  %v1460 = vpop.f32.mrb[0].mxu0
  %v1461 = vpop.f32.mrb[0].mxu0
  %v1462 = vpop.f32.mrb[0].mxu0
  %1463 = vdwg.mxu0
  %1464 = vmatprep.subr.bf16.mxu0 0
  %1465 = vmatpush1.bf16.msra.mxu0 %v581
  %1466 = vmatprep.subr.bf16.mxu0 0
  %1467 = vmatpush1.bf16.msra.mxu0 %v582
  %1468 = vmatprep.subr.bf16.mxu0 0
  %1469 = vmatpush1.bf16.msra.mxu0 %v583
  %1470 = vmatprep.subr.bf16.mxu0 0
  %1471 = vmatpush1.bf16.msra.mxu0 %v584
  %1472 = vmatprep.subr.bf16.mxu0 0
  %1473 = vmatpush1.bf16.msra.mxu0 %v585
  %1474 = vmatprep.subr.bf16.mxu0 0
  %1475 = vmatpush1.bf16.msra.mxu0 %v586
  %1476 = vmatprep.subr.bf16.mxu0 0
  %1477 = vmatpush1.bf16.msra.mxu0 %v587
  %1478 = vmatprep.subr.bf16.mxu0 0
  %1479 = vmatpush1.bf16.msra.mxu0 %v588
  %1480 = vmatprep.subr.bf16.mxu0 0
  %1481 = vmatpush1.bf16.msra.mxu0 %v589
  %1482 = vmatprep.subr.bf16.mxu0 0
  %1483 = vmatpush1.bf16.msra.mxu0 %v590
  %1484 = vmatprep.subr.bf16.mxu0 0
  %1485 = vmatpush1.bf16.msra.mxu0 %v591
  %1486 = vmatprep.subr.bf16.mxu0 0
  %1487 = vmatpush1.bf16.msra.mxu0 %v1206
  %1488 = vmatprep.subr.bf16.mxu0 0
  %1489 = vmatpush1.bf16.msra.mxu0 0
  %1490 = vmatprep.subr.bf16.mxu0 0
  %1491 = vmatpush1.bf16.msra.mxu0 0
  %1492 = vmatprep.subr.bf16.mxu0 0
  %1493 = vmatpush1.bf16.msra.mxu0 0
  %1494 = vmatprep.subr.bf16.mxu0 0
  %1495 = vmatpush1.bf16.msra.mxu0 0
  %1496 = vmatprep.mubr.bf16.mxu0 %v1121
  %1497 = vmatmul.mubr.bf16.gmra.mrb[0].mxu0 %v925
  %v1498 = vpop.f32.mrb[0].mxu0
  %v1499 = vadd.f32 %v1243, %v1498
  %v1500 = vpop.f32.mrb[0].mxu0
  %v1501 = vpop.f32.mrb[0].mxu0
  %v1502 = vadd.f32 %v1246, %v1501
  %v1503 = vpop.f32.mrb[0].mxu0
  %1504 = vmatprep.mubr.bf16.mxu0 %v1124
  %1505 = vmatmul.mubr.bf16.gmra.mrb[0].mxu0 %v929
  %v1506 = vpop.f32.mrb[0].mxu0
  %v1507 = vadd.f32 %v1251, %v1506
  %v1508 = vpop.f32.mrb[0].mxu0
  %v1509 = vpop.f32.mrb[0].mxu0
  %v1510 = vadd.f32 %v1254, %v1509
  %v1511 = vpop.f32.mrb[0].mxu0
  %1512 = vmatprep.mubr.bf16.mxu0 %v1127
  %1513 = vmatmul.mubr.bf16.gmra.mrb[0].mxu0 %v933
  %v1514 = vpop.f32.mrb[0].mxu0
  %v1515 = vadd.f32 %v1259, %v1514
  %v1516 = vpop.f32.mrb[0].mxu0
  %v1517 = vpop.f32.mrb[0].mxu0
  %v1518 = vadd.f32 %v1262, %v1517
  %v1519 = vpop.f32.mrb[0].mxu0
  %1520 = vmatprep.mubr.bf16.mxu0 %v1130
  %1521 = vmatmul.mubr.bf16.gmra.mrb[0].mxu0 %v937
  %v1522 = vpop.f32.mrb[0].mxu0
  %v1523 = vadd.f32 %v1267, %v1522
  %v1524 = vpop.f32.mrb[0].mxu0
  %v1525 = vpop.f32.mrb[0].mxu0
  %v1526 = vadd.f32 %v1270, %v1525
  %v1527 = vpop.f32.mrb[0].mxu0
  %1528 = vmatprep.mubr.bf16.mxu0 %v1133
  %1529 = vmatmul.mubr.bf16.gmra.mrb[0].mxu0 %v941
  %v1530 = vpop.f32.mrb[0].mxu0
  %v1531 = vadd.f32 %v1275, %v1530
  %v1532 = vpop.f32.mrb[0].mxu0
  %v1533 = vpop.f32.mrb[0].mxu0
  %v1534 = vadd.f32 %v1278, %v1533
  %v1535 = vpop.f32.mrb[0].mxu0
  %1536 = vmatprep.mubr.bf16.mxu0 %v1136
  %1537 = vmatmul.mubr.bf16.gmra.mrb[0].mxu0 %v945
  %v1538 = vpop.f32.mrb[0].mxu0
  %v1539 = vadd.f32 %v1283, %v1538
  %v1540 = vpop.f32.mrb[0].mxu0
  %v1541 = vpop.f32.mrb[0].mxu0
  %v1542 = vadd.f32 %v1286, %v1541
  %v1543 = vpop.f32.mrb[0].mxu0
  %1544 = vmatprep.mubr.bf16.mxu0 %v1139
  %1545 = vmatmul.mubr.bf16.gmra.mrb[0].mxu0 %v949
  %v1546 = vpop.f32.mrb[0].mxu0
  %v1547 = vadd.f32 %v1291, %v1546
  %v1548 = vpop.f32.mrb[0].mxu0
  %v1549 = vpop.f32.mrb[0].mxu0
  %v1550 = vadd.f32 %v1294, %v1549
  %v1551 = vpop.f32.mrb[0].mxu0
  %1552 = vmatprep.mubr.bf16.mxu0 %v1142
  %1553 = vmatmul.mubr.bf16.gmra.mrb[0].mxu0 %v953
  %v1554 = vpop.f32.mrb[0].mxu0
  %v1555 = vadd.f32 %v1299, %v1554
  %v1556 = vpop.f32.mrb[0].mxu0
  %v1557 = vpop.f32.mrb[0].mxu0
  %v1558 = vadd.f32 %v1302, %v1557
  %v1559 = vpop.f32.mrb[0].mxu0
  %1560 = vmatprep.mubr.bf16.mxu0 %v1145
  %1561 = vmatmul.mubr.bf16.gmra.mrb[0].mxu0 %v957
  %v1562 = vpop.f32.mrb[0].mxu0
  %v1563 = vadd.f32 %v1307, %v1562
  %v1564 = vpop.f32.mrb[0].mxu0
  %v1565 = vpop.f32.mrb[0].mxu0
  %v1566 = vadd.f32 %v1310, %v1565
  %v1567 = vpop.f32.mrb[0].mxu0
  %1568 = vmatprep.mubr.bf16.mxu0 %v1148
  %1569 = vmatmul.mubr.bf16.gmra.mrb[0].mxu0 %v961
  %v1570 = vpop.f32.mrb[0].mxu0
  %v1571 = vadd.f32 %v1315, %v1570
  %v1572 = vpop.f32.mrb[0].mxu0
  %v1573 = vpop.f32.mrb[0].mxu0
  %v1574 = vadd.f32 %v1318, %v1573
  %v1575 = vpop.f32.mrb[0].mxu0
  %1576 = vmatprep.mubr.bf16.mxu0 %v1151
  %1577 = vmatmul.mubr.bf16.gmra.mrb[0].mxu0 %v965
  %v1578 = vpop.f32.mrb[0].mxu0
  %v1579 = vadd.f32 %v1323, %v1578
  %v1580 = vpop.f32.mrb[0].mxu0
  %v1581 = vpop.f32.mrb[0].mxu0
  %v1582 = vadd.f32 %v1326, %v1581
  %v1583 = vpop.f32.mrb[0].mxu0
  %1584 = vmatprep.mubr.bf16.mxu0 %v1154
  %1585 = vmatmul.mubr.bf16.gmra.mrb[0].mxu0 %v969
  %v1586 = vpop.f32.mrb[0].mxu0
  %v1587 = vadd.f32 %v1331, %v1586
  %v1588 = vpop.f32.mrb[0].mxu0
  %v1589 = vpop.f32.mrb[0].mxu0
  %v1590 = vadd.f32 %v1334, %v1589
  %v1591 = vpop.f32.mrb[0].mxu0
  %1592 = vmatprep.mubr.bf16.mxu0 %v1157
  %1593 = vmatmul.mubr.bf16.gmra.mrb[0].mxu0 %v973
  %v1594 = vpop.f32.mrb[0].mxu0
  %v1595 = vadd.f32 %v1339, %v1594
  %v1596 = vpop.f32.mrb[0].mxu0
  %v1597 = vpop.f32.mrb[0].mxu0
  %v1598 = vadd.f32 %v1342, %v1597
  %v1599 = vpop.f32.mrb[0].mxu0
  %1600 = vmatprep.mubr.bf16.mxu0 %v1160
  %1601 = vmatmul.mubr.bf16.gmra.mrb[0].mxu0 %v977
  %v1602 = vpop.f32.mrb[0].mxu0
  %v1603 = vadd.f32 %v1347, %v1602
  %v1604 = vpop.f32.mrb[0].mxu0
  %v1605 = vpop.f32.mrb[0].mxu0
  %v1606 = vadd.f32 %v1350, %v1605
  %v1607 = vpop.f32.mrb[0].mxu0
  %1608 = vmatprep.mubr.bf16.mxu0 %v1163
  %1609 = vmatmul.mubr.bf16.gmra.mrb[0].mxu0 %v981
  %v1610 = vpop.f32.mrb[0].mxu0
  %v1611 = vadd.f32 %v1355, %v1610
  %v1612 = vpop.f32.mrb[0].mxu0
  %v1613 = vpop.f32.mrb[0].mxu0
  %v1614 = vadd.f32 %v1358, %v1613
  %v1615 = vpop.f32.mrb[0].mxu0
  %1616 = vmatprep.mubr.bf16.mxu0 %v1166
  %1617 = vmatmul.mubr.bf16.gmra.mrb[0].mxu0 %v985
  %v1618 = vpop.f32.mrb[0].mxu0
  %v1619 = vadd.f32 %v1363, %v1618
  %v1620 = vpop.f32.mrb[0].mxu0
  %v1621 = vpop.f32.mrb[0].mxu0
  %v1622 = vadd.f32 %v1366, %v1621
  %v1623 = vpop.f32.mrb[0].mxu0
  %1624 = vmatprep.mubr.bf16.mxu0 %v1169
  %1625 = vmatmul.mubr.bf16.gmra.mrb[0].mxu0 %v989
  %v1626 = vpop.f32.mrb[0].mxu0
  %v1627 = vadd.f32 %v1371, %v1626
  %v1628 = vpop.f32.mrb[0].mxu0
  %v1629 = vpop.f32.mrb[0].mxu0
  %v1630 = vadd.f32 %v1374, %v1629
  %v1631 = vpop.f32.mrb[0].mxu0
  %1632 = vmatprep.mubr.bf16.mxu0 %v1172
  %1633 = vmatmul.mubr.bf16.gmra.mrb[0].mxu0 %v993
  %v1634 = vpop.f32.mrb[0].mxu0
  %v1635 = vadd.f32 %v1379, %v1634
  %v1636 = vpop.f32.mrb[0].mxu0
  %v1637 = vpop.f32.mrb[0].mxu0
  %v1638 = vadd.f32 %v1382, %v1637
  %v1639 = vpop.f32.mrb[0].mxu0
  %1640 = vmatprep.mubr.bf16.mxu0 %v1175
  %1641 = vmatmul.mubr.bf16.gmra.mrb[0].mxu0 %v997
  %v1642 = vpop.f32.mrb[0].mxu0
  %v1643 = vadd.f32 %v1387, %v1642
  %v1644 = vpop.f32.mrb[0].mxu0
  %v1645 = vpop.f32.mrb[0].mxu0
  %v1646 = vadd.f32 %v1390, %v1645
  %v1647 = vpop.f32.mrb[0].mxu0
  %1648 = vmatprep.mubr.bf16.mxu0 %v1178
  %1649 = vmatmul.mubr.bf16.gmra.mrb[0].mxu0 %v1001
  %v1650 = vpop.f32.mrb[0].mxu0
  %v1651 = vadd.f32 %v1395, %v1650
  %v1652 = vpop.f32.mrb[0].mxu0
  %v1653 = vpop.f32.mrb[0].mxu0
  %v1654 = vadd.f32 %v1398, %v1653
  %v1655 = vpop.f32.mrb[0].mxu0
  %1656 = vmatprep.mubr.bf16.mxu0 %v1181
  %1657 = vmatmul.mubr.bf16.gmra.mrb[0].mxu0 %v1005
  %v1658 = vpop.f32.mrb[0].mxu0
  %v1659 = vadd.f32 %v1403, %v1658
  %v1660 = vpop.f32.mrb[0].mxu0
  %v1661 = vpop.f32.mrb[0].mxu0
  %v1662 = vadd.f32 %v1406, %v1661
  %v1663 = vpop.f32.mrb[0].mxu0
  %1664 = vmatprep.mubr.bf16.mxu0 %v1184
  %1665 = vmatmul.mubr.bf16.gmra.mrb[0].mxu0 %v1009
  %v1666 = vpop.f32.mrb[0].mxu0
  %v1667 = vadd.f32 %v1411, %v1666
  %v1668 = vpop.f32.mrb[0].mxu0
  %v1669 = vpop.f32.mrb[0].mxu0
  %v1670 = vadd.f32 %v1414, %v1669
  %v1671 = vpop.f32.mrb[0].mxu0
  %1672 = vmatprep.mubr.bf16.mxu0 %v1187
  %1673 = vmatmul.mubr.bf16.gmra.mrb[0].mxu0 %v1013
  %v1674 = vpop.f32.mrb[0].mxu0
  %v1675 = vadd.f32 %v1419, %v1674
  %v1676 = vpop.f32.mrb[0].mxu0
  %v1677 = vpop.f32.mrb[0].mxu0
  %v1678 = vadd.f32 %v1422, %v1677
  %v1679 = vpop.f32.mrb[0].mxu0
  %1680 = vmatprep.mubr.bf16.mxu0 %v1190
  %1681 = vmatmul.mubr.bf16.gmra.mrb[0].mxu0 %v1017
  %v1682 = vpop.f32.mrb[0].mxu0
  %v1683 = vadd.f32 %v1427, %v1682
  %v1684 = vpop.f32.mrb[0].mxu0
  %v1685 = vpop.f32.mrb[0].mxu0
  %v1686 = vadd.f32 %v1430, %v1685
  %v1687 = vpop.f32.mrb[0].mxu0
  %1688 = vmatprep.mubr.bf16.mxu0 %v1193
  %1689 = vmatmul.mubr.bf16.gmra.mrb[0].mxu0 %v1021
  %v1690 = vpop.f32.mrb[0].mxu0
  %v1691 = vadd.f32 %v1435, %v1690
  %v1692 = vpop.f32.mrb[0].mxu0
  %v1693 = vpop.f32.mrb[0].mxu0
  %v1694 = vadd.f32 %v1438, %v1693
  %v1695 = vpop.f32.mrb[0].mxu0
  %1696 = vmatprep.mubr.bf16.mxu0 %v1196
  %1697 = vmatmul.mubr.bf16.gmra.mrb[0].mxu0 %v1025
  %v1698 = vpop.f32.mrb[0].mxu0
  %v1699 = vadd.f32 %v1443, %v1698
  %v1700 = vpop.f32.mrb[0].mxu0
  %v1701 = vpop.f32.mrb[0].mxu0
  %v1702 = vadd.f32 %v1446, %v1701
  %v1703 = vpop.f32.mrb[0].mxu0
  %1704 = vmatprep.mubr.bf16.mxu0 %v1199
  %1705 = vmatmul.mubr.bf16.gmra.mrb[0].mxu0 %v1029
  %v1706 = vpop.f32.mrb[0].mxu0
  %v1707 = vadd.f32 %v1451, %v1706
  %v1708 = vpop.f32.mrb[0].mxu0
  %v1709 = vpop.f32.mrb[0].mxu0
  %v1710 = vadd.f32 %v1454, %v1709
  %v1711 = vpop.f32.mrb[0].mxu0
  %1712 = vmatprep.mubr.bf16.mxu0 %v1202
  %1713 = vmatmul.mubr.bf16.gmra.mrb[0].mxu0 %v1033
  %v1714 = vpop.f32.mrb[0].mxu0
  %v1715 = vadd.f32 %v1459, %v1714
  %v1716 = vpop.f32.mrb[0].mxu0
  %v1717 = vpop.f32.mrb[0].mxu0
  %v1718 = vpop.f32.mrb[0].mxu0
  %1719 = vdwg.mxu0
  %vm1720 = vcmask 400384
  %1721 = vst.msk [vmem:[%s3] sm:$0xff] %vm1720, %v1499
  %1722 = vst.msk [vmem:[%s3 + $0x8] sm:$0xff] %vm1720, %v1502
  %1723 = vst.msk [vmem:[%s3 + $0x10] sm:$0xff] %vm1720, %v1507
  %1724 = vst.msk [vmem:[%s3 + $0x18] sm:$0xff] %vm1720, %v1510
  %1725 = vst.msk [vmem:[%s3 + $0x20] sm:$0xff] %vm1720, %v1515
  %1726 = vst.msk [vmem:[%s3 + $0x28] sm:$0xff] %vm1720, %v1518
  %1727 = vst.msk [vmem:[%s3 + $0x30] sm:$0xff] %vm1720, %v1523
  %1728 = vst.msk [vmem:[%s3 + $0x38] sm:$0xff] %vm1720, %v1526
  %1729 = vst.msk [vmem:[%s3 + $0x40] sm:$0xff] %vm1720, %v1531
  %1730 = vst.msk [vmem:[%s3 + $0x48] sm:$0xff] %vm1720, %v1534
  %1731 = vst.msk [vmem:[%s3 + $0x50] sm:$0xff] %vm1720, %v1539
  %1732 = vst.msk [vmem:[%s3 + $0x58] sm:$0xff] %vm1720, %v1542
  %1733 = vst.msk [vmem:[%s3 + $0x60] sm:$0xff] %vm1720, %v1547
  %1734 = vst.msk [vmem:[%s3 + $0x68] sm:$0xff] %vm1720, %v1550
  %1735 = vst.msk [vmem:[%s3 + $0x70] sm:$0xff] %vm1720, %v1555
  %1736 = vst.msk [vmem:[%s3 + $0x78] sm:$0xff] %vm1720, %v1558
  %1737 = vst.msk [vmem:[%s3 + $0x80] sm:$0xff] %vm1720, %v1563
  %1738 = vst.msk [vmem:[%s3 + $0x88] sm:$0xff] %vm1720, %v1566
  %1739 = vst.msk [vmem:[%s3 + $0x90] sm:$0xff] %vm1720, %v1571
  %1740 = vst.msk [vmem:[%s3 + $0x98] sm:$0xff] %vm1720, %v1574
  %1741 = vst.msk [vmem:[%s3 + $0xa0] sm:$0xff] %vm1720, %v1579
  %1742 = vst.msk [vmem:[%s3 + $0xa8] sm:$0xff] %vm1720, %v1582
  %1743 = vst.msk [vmem:[%s3 + $0xb0] sm:$0xff] %vm1720, %v1587
  %1744 = vst.msk [vmem:[%s3 + $0xb8] sm:$0xff] %vm1720, %v1590
  %1745 = vst.msk [vmem:[%s3 + $0xc0] sm:$0xff] %vm1720, %v1595
  %1746 = vst.msk [vmem:[%s3 + $0xc8] sm:$0xff] %vm1720, %v1598
  %1747 = vst.msk [vmem:[%s3 + $0xd0] sm:$0xff] %vm1720, %v1603
  %1748 = vst.msk [vmem:[%s3 + $0xd8] sm:$0xff] %vm1720, %v1606
  %1749 = vst.msk [vmem:[%s3 + $0xe0] sm:$0xff] %vm1720, %v1611
  %1750 = vst.msk [vmem:[%s3 + $0xe8] sm:$0xff] %vm1720, %v1614
  %1751 = vst.msk [vmem:[%s3 + $0xf0] sm:$0xff] %vm1720, %v1619
  %1752 = vst.msk [vmem:[%s3 + $0xf8] sm:$0xff] %vm1720, %v1622
  %1753 = vst.msk [vmem:[%s3 + $0x100] sm:$0xff] %vm1720, %v1627
  %1754 = vst.msk [vmem:[%s3 + $0x108] sm:$0xff] %vm1720, %v1630
  %1755 = vst.msk [vmem:[%s3 + $0x110] sm:$0xff] %vm1720, %v1635
  %1756 = vst.msk [vmem:[%s3 + $0x118] sm:$0xff] %vm1720, %v1638
  %1757 = vst.msk [vmem:[%s3 + $0x120] sm:$0xff] %vm1720, %v1643
  %1758 = vst.msk [vmem:[%s3 + $0x128] sm:$0xff] %vm1720, %v1646
  %1759 = vst.msk [vmem:[%s3 + $0x130] sm:$0xff] %vm1720, %v1651
  %1760 = vst.msk [vmem:[%s3 + $0x138] sm:$0xff] %vm1720, %v1654
  %1761 = vst.msk [vmem:[%s3 + $0x140] sm:$0xff] %vm1720, %v1659
  %1762 = vst.msk [vmem:[%s3 + $0x148] sm:$0xff] %vm1720, %v1662
  %1763 = vst.msk [vmem:[%s3 + $0x150] sm:$0xff] %vm1720, %v1667
  %1764 = vst.msk [vmem:[%s3 + $0x158] sm:$0xff] %vm1720, %v1670
  %1765 = vst.msk [vmem:[%s3 + $0x160] sm:$0xff] %vm1720, %v1675
  %1766 = vst.msk [vmem:[%s3 + $0x168] sm:$0xff] %vm1720, %v1678
  %1767 = vst.msk [vmem:[%s3 + $0x170] sm:$0xff] %vm1720, %v1683
  %1768 = vst.msk [vmem:[%s3 + $0x178] sm:$0xff] %vm1720, %v1686
  %1769 = vst.msk [vmem:[%s3 + $0x180] sm:$0xff] %vm1720, %v1691
  %1770 = vst.msk [vmem:[%s3 + $0x188] sm:$0xff] %vm1720, %v1694
  %1771 = vst.msk [vmem:[%s3 + $0x190] sm:$0xff] %vm1720, %v1699
  %1772 = vst.msk [vmem:[%s3 + $0x198] sm:$0xff] %vm1720, %v1702
  %1773 = vst.msk [vmem:[%s3 + $0x1a0] sm:$0xff] %vm1720, %v1707
  %1774 = vst.msk [vmem:[%s3 + $0x1a8] sm:$0xff] %vm1720, %v1710
  %1775 = vst.msk [vmem:[%s3 + $0x1b0] sm:$0xff] %vm1720, %v1715
  // Predicated region
  $region14: #{mul_conv1x1.1} parent=0 // pred_check
    _
  $region15: #{mul_conv1x1.1} parent=0 // pred_check_branch
    %1777 = sbr.rel (0) target = $region17
  $region16: #{mul_conv1x1.1} parent=0 // pred_region
    _
  $region17: #{mul_conv1x1.1} parent=0 // pred_fallthru
    _
  // Predicated region
  $region18: #{mul_conv1x1.1} parent=0 // pred_check
    _
  $region19: #{mul_conv1x1.1} parent=0 // pred_check_branch
    %1779 = sbr.rel (0) target = $region21
  $region20: #{mul_conv1x1.1} parent=0 // pred_region
    _
  $region21: #{mul_conv1x1.1} parent=0 // pred_fallthru
    _

</llo_original>
